<compile_context>
chip_gen: v5e
topology: v5e:2x2
jax: 0.10.0
libtpu: 0.0.40
codegen_flags: <defaults>
</compile_context>

<pallas_src>
import numpy as np
import jax
import jax.numpy as jnp
from jax import lax
from jax.experimental import pallas as pl
from jax.experimental.pallas import tpu as pltpu


def _make_kernel(*, n_actual, tn, nb_inner, C):
    def kernel(labels_ref, ratio_ref, wT_ref, cv_ref, ys_ref, m_ref, clsw_ref,
               out_ref, loss_acc, w_acc):
        s = pl.program_id(0)                       # parallel (core) split
        b = pl.program_id(1)                       # inner batch-block index
        block_base = (s * nb_inner + b) * tn       # global index of first sample

        # per-split accumulator init (scratch is per-core, so no cross-core race)
        @pl.when(b == 0)
        def _():
            loss_acc[...] = jnp.zeros_like(loss_acc)
            w_acc[...] = jnp.zeros_like(w_acc)

        # hoisted once per grid step
        half_ratio = 0.5 * ratio_ref[0]
        Wt = wT_ref[...]                           # (A, C)  == fc weight transposed
        m_row = m_ref[...]                         # (1, C)
        clsw_row = clsw_ref[...]                   # (1, C)
        lane_ids = lax.broadcasted_iota(jnp.int32, (1, C), 1)

        def body(i, carry):
            lp, wp = carry
            g = block_base + i
            lbl = labels_ref[g]                    # int32 scalar from SMEM

            onehot = (lane_ids == lbl).astype(jnp.float32)            # (1, C)

            # w_y as a column via masked lane-reduce (no MXU round-trip)
            wy_col = jnp.sum(Wt * onehot, axis=1, keepdims=True)      # (A, 1)
            d_t = Wt - wy_col                                         # (A, C) = (W - w_y)^T

            cv_y = cv_ref[lbl]                                        # (A, A)
            m2 = jnp.dot(cv_y, d_t, preferred_element_type=jnp.float32)  # (A, C)
            # diag(D CV D^T) without the (C,C) matmul / eye mask
            sigma2 = jnp.sum(d_t * m2, axis=0, keepdims=True)         # (1, C)

            ys_row = ys_ref[pl.ds(i, 1), :]                           # (1, C)
            aug = ys_row + half_ratio * sigma2
            margin = jnp.sum(m_row * onehot, axis=1, keepdims=True)   # (1, 1)
            aug = aug - margin * onehot

            # weighted cross-entropy (stable log-softmax)
            mx = jnp.max(aug, axis=1, keepdims=True)
            lse = mx + jnp.log(jnp.sum(jnp.exp(aug - mx), axis=1, keepdims=True))
            logit_y = jnp.sum(aug * onehot, axis=1, keepdims=True)
            ce = lse - logit_y                                        # (1, 1)

            w_n = jnp.sum(clsw_row * onehot, axis=1, keepdims=True)   # (1, 1)
            valid = (g < n_actual).astype(jnp.float32)                # padding mask
            w_n = w_n * valid
            return (lp + w_n * ce, wp + w_n)

        init = (jnp.zeros((1, 1), jnp.float32), jnp.zeros((1, 1), jnp.float32))
        lp, wp = lax.fori_loop(0, tn, body, init, unroll=True)
        loss_acc[...] += lp
        w_acc[...] += wp

        # single lane-dense store per split (no per-step masked HBM stores)
        @pl.when(b == nb_inner - 1)
        def _():
            r = lax.broadcasted_iota(jnp.int32, (8, 128), 0)
            c = lax.broadcasted_iota(jnp.int32, (8, 128), 1)
            lv = jnp.broadcast_to(loss_acc[...], (8, 128))
            wv = jnp.broadcast_to(w_acc[...], (8, 128))
            out_ref[...] = jnp.where((r == 0) & (c == 0), lv,
                                     jnp.where((r == 0) & (c == 1), wv, 0.0))

    return kernel


def ldam_meta_loss(fc_weight, features, y_s, labels, ratio, weights, cv, m_list,
                   *, tn=8):
    """Returns F.cross_entropy(IDASAug(...), labels, weight=weights) (mean reduction)."""
    N, A = features.shape
    C = y_s.shape[1]
    assert fc_weight.shape == (C, A) and cv.shape == (C, A, A)

    nb = -(-N // tn)                       # number of TN-sample blocks
    n_pad = nb * tn
    nsplit = 2 if (nb >= 2 and nb % 2 == 0) else 1   # v7x: 2 TCs; inert on v5e/v6e
    nb_inner = nb // nsplit

    # guard the cv gather against out-of-range labels (no runtime bounds check on TPU)
    labels_i = jnp.clip(labels.astype(jnp.int32), 0, C - 1)
    labels_pad = jnp.pad(labels_i, (0, n_pad - N))
    ys_pad = jnp.pad(y_s.astype(jnp.float32), ((0, n_pad - N), (0, 0)))
    w_t = jnp.transpose(fc_weight.astype(jnp.float32))     # (A, C)

    grid_spec = pltpu.PrefetchScalarGridSpec(
        num_scalar_prefetch=1,                              # labels -> SMEM
        grid=(nsplit, nb_inner),
        in_specs=[
            pl.BlockSpec(memory_space=pltpu.MemorySpace.SMEM),               # ratio (1,)
            pl.BlockSpec((A, C), lambda s, b, lbl: (0, 0)),                  # W^T resident
            pl.BlockSpec((C, A, A), lambda s, b, lbl: (0, 0, 0)),            # cv resident
            pl.BlockSpec((tn, C), lambda s, b, lbl: (s * nb_inner + b, 0)),  # y_s block
            pl.BlockSpec((1, C), lambda s, b, lbl: (0, 0)),                  # m_list
            pl.BlockSpec((1, C), lambda s, b, lbl: (0, 0)),                  # class weights
        ],
        out_specs=pl.BlockSpec((8, 128), lambda s, b, lbl: (s, 0)),          # per-split partials
        scratch_shapes=[pltpu.VMEM((1, 1), jnp.float32),
                        pltpu.VMEM((1, 1), jnp.float32)],
    )

    out = pl.pallas_call(
        _make_kernel(n_actual=N, tn=tn, nb_inner=nb_inner, C=C),
        out_shape=jax.ShapeDtypeStruct((nsplit * 8, 128), jnp.float32),
        grid_spec=grid_spec,
        compiler_params=pltpu.CompilerParams(
            dimension_semantics=("parallel", "arbitrary")),
    )(labels_pad,
      jnp.asarray([ratio], jnp.float32),
      w_t,
      cv.astype(jnp.float32),
      ys_pad,
      m_list.reshape(1, C).astype(jnp.float32),
      weights.reshape(1, C).astype(jnp.float32))

    # reduce per-split partials (row 0, lanes 0/1 of each (8,128) block; rest are zero)
    loss_sum = jnp.sum(out[:, 0])
    w_sum = jnp.sum(out[:, 1])
    return loss_sum / w_sum


def reference_loss(fc_weight, y_s, labels, ratio, weights, cv, m_list):
    """Pure-JAX reference mirroring the PyTorch semantics."""
    N, C = y_s.shape
    w_y = fc_weight[labels]                                 # (N, A)
    D = fc_weight[None, :, :] - w_y[:, None, :]             # (N, C, A)
    cv_y = cv[labels]                                       # (N, A, A)
    sigma2 = ratio * jnp.einsum('nca,nab,ncb->nc', D, cv_y, D)
    aug = y_s + 0.5 * sigma2
    onehot = jax.nn.one_hot(labels, C, dtype=jnp.float32)
    aug = aug - m_list[labels][:, None] * onehot
    logp = jax.nn.log_softmax(aug, axis=1)
    ce = -jnp.sum(logp * onehot, axis=1)
    w = weights[labels]
    return jnp.sum(w * ce) / jnp.sum(w)


if __name__ == "__main__":
    N, C, A = 16, 8, 32
    key = jax.random.PRNGKey(0)
    k_w, k_f, k_l, k_cv = jax.random.split(key, 4)

    fc_weight = jax.random.normal(k_w, (C, A), jnp.float32) * 0.1      # fc: Linear(A -> C)
    features = jax.random.normal(k_f, (N, A), jnp.float32)
    y_s = features @ fc_weight.T                                       # logits from fc
    labels = jax.random.randint(k_l, (N,), 0, C, dtype=jnp.int32)
    weights = jnp.ones((C,), jnp.float32) + 0.1 * jnp.arange(C, dtype=jnp.float32)

    # per-class PSD covariance matrices
    B = jax.random.normal(k_cv, (C, A, A), jnp.float32) * 0.05
    cv = jnp.einsum('cij,ckj->cik', B, B)

    # LDAM margins from __init__
    cls_num_list = np.array([100, 80, 60, 40, 20, 10, 5, 2], dtype=np.float64)
    max_m = 0.5
    m_np = 1.0 / np.sqrt(np.sqrt(cls_num_list))
    m_np = m_np * (max_m / np.max(m_np))
    m_list = jnp.asarray(m_np, jnp.float32)

    ratio = 0.5

    loss = ldam_meta_loss(fc_weight, features, y_s, labels, ratio, weights, cv, m_list)
    jax.block_until_ready(loss)

    ref = reference_loss(fc_weight, y_s, labels, ratio, weights, cv, m_list)
    np.testing.assert_allclose(np.asarray(loss), np.asarray(ref), rtol=3e-2, atol=3e-2)

    print("KERNEL_OK")
</pallas_src>

<mosaic_0001>
module attributes {stable_mosaic.version = 11 : i64} {
  func.func @kernel(%arg0: i32, %arg1: i32, %arg2: memref<16xi32, #tpu.memory_space<smem>>, %arg3: memref<1xf32, #tpu.memory_space<smem>>, %arg4: memref<32x8xf32, #tpu.memory_space<vmem>>, %arg5: memref<8x32x32xf32, #tpu.memory_space<vmem>>, %arg6: memref<8x8xf32, #tpu.memory_space<vmem>>, %arg7: memref<1x8xf32, #tpu.memory_space<vmem>>, %arg8: memref<1x8xf32, #tpu.memory_space<vmem>>, %arg9: memref<8x128xf32, #tpu.memory_space<vmem>>, %arg10: memref<1x1xf32, #tpu.memory_space<vmem>>, %arg11: memref<1x1xf32, #tpu.memory_space<vmem>>) attributes {dimension_semantics = [#tpu.dimension_semantics<parallel>, #tpu.dimension_semantics<arbitrary>], iteration_bounds = array<i64: 2, 1>, scalar_prefetch = 1 : i64, scratch_operands = 2 : i64, tpu.core_type = #tpu.core_type<tc>, window_params = [{transform_indices = @transform_0, window_bounds = array<i64: 1>}, {pipeline_mode = #tpu.pipeline_mode<synchronous>, transform_indices = @transform_1, window_bounds = array<i64: 32, 8>}, {pipeline_mode = #tpu.pipeline_mode<synchronous>, transform_indices = @transform_2, window_bounds = array<i64: 8, 32, 32>}, {transform_indices = @transform_3, window_bounds = array<i64: 8, 8>}, {pipeline_mode = #tpu.pipeline_mode<synchronous>, transform_indices = @transform_4, window_bounds = array<i64: 1, 8>}, {pipeline_mode = #tpu.pipeline_mode<synchronous>, transform_indices = @transform_5, window_bounds = array<i64: 1, 8>}, {transform_indices = @transform_6, window_bounds = array<i64: 8, 128>}]} {
    %c1_i32 = arith.constant 1 : i32
    %0 = arith.muli %arg0, %c1_i32 : i32
    %1 = arith.addi %0, %arg1 : i32
    %c8_i32 = arith.constant 8 : i32
    %2 = arith.muli %1, %c8_i32 : i32
    %c0_i32 = arith.constant 0 : i32
    %3 = arith.cmpi eq, %arg1, %c0_i32 : i32
    %4 = arith.extui %3 : i1 to i32
    %c0_i32_0 = arith.constant 0 : i32
    %5 = arith.cmpi ne, %4, %c0_i32_0 : i32
    scf.if %5 {
      %cst_117 = arith.constant 0.000000e+00 : f32
      %463 = vector.broadcast %cst_117 : f32 to vector<1x1xf32>
      %c0_118 = arith.constant 0 : index
      %c0_119 = arith.constant 0 : index
      %464 = vector.load %arg10[%c0_118, %c0_119] : memref<1x1xf32, #tpu.memory_space<vmem>>, vector<1x1xf32>
      tpu.vector_store %arg10[%c0_118, %c0_119], %463 {strides = array<i32>} : memref<1x1xf32, #tpu.memory_space<vmem>>, vector<1x1xf32>,
      %cst_120 = arith.constant 0.000000e+00 : f32
      %465 = vector.broadcast %cst_120 : f32 to vector<1x1xf32>
      %c0_121 = arith.constant 0 : index
      %c0_122 = arith.constant 0 : index
      %466 = vector.load %arg11[%c0_121, %c0_122] : memref<1x1xf32, #tpu.memory_space<vmem>>, vector<1x1xf32>
      tpu.vector_store %arg11[%c0_121, %c0_122], %465 {strides = array<i32>} : memref<1x1xf32, #tpu.memory_space<vmem>>, vector<1x1xf32>,
    } else {
    }
    %c0 = arith.constant 0 : index
    %6 = memref.load %arg3[%c0] : memref<1xf32, #tpu.memory_space<smem>>
    %cst = arith.constant 5.000000e-01 : f32
    %7 = arith.mulf %cst, %6 : f32
    %c0_1 = arith.constant 0 : index
    %c0_2 = arith.constant 0 : index
    %8 = vector.load %arg4[%c0_1, %c0_2] : memref<32x8xf32, #tpu.memory_space<vmem>>, vector<32x8xf32>
    %c0_3 = arith.constant 0 : index
    %c0_4 = arith.constant 0 : index
    %9 = vector.load %arg7[%c0_3, %c0_4] : memref<1x8xf32, #tpu.memory_space<vmem>>, vector<1x8xf32>
    %c0_5 = arith.constant 0 : index
    %c0_6 = arith.constant 0 : index
    %10 = vector.load %arg8[%c0_5, %c0_6] : memref<1x8xf32, #tpu.memory_space<vmem>>, vector<1x8xf32>
    %11 = tpu.iota {dimensions = array<i32: 1>} : vector<1x8xi32>
    %cst_7 = arith.constant 0.000000e+00 : f32
    %12 = vector.broadcast %cst_7 : f32 to vector<1x1xf32>
    %cst_8 = arith.constant 0.000000e+00 : f32
    %13 = vector.broadcast %cst_8 : f32 to vector<1x1xf32>
    %c0_i32_9 = arith.constant 0 : i32
    %14 = arith.addi %2, %c0_i32_9 : i32
    %15 = arith.index_cast %14 : i32 to index
    %16 = memref.load %arg2[%15] : memref<16xi32, #tpu.memory_space<smem>>
    %17 = vector.broadcast %16 : i32 to vector<1x8xi32>
    %18 = arith.cmpi eq, %11, %17 : vector<1x8xi32>
    %19 = arith.extui %18 : vector<1x8xi1> to vector<1x8xi32>
    %20 = arith.sitofp %19 : vector<1x8xi32> to vector<1x8xf32>
    %21 = vector.broadcast %20 : vector<1x8xf32> to vector<32x8xf32>
    %22 = arith.mulf %8, %21 : vector<32x8xf32>
    %cst_10 = arith.constant dense<0.000000e+00> : vector<32xf32>
    %23 = vector.multi_reduction <add>, %22, %cst_10 [1] : vector<32x8xf32> to vector<32xf32>
    %24 = vector.shape_cast %23 : vector<32xf32> to vector<32x1xf32>
    %25 = vector.broadcast %24 : vector<32x1xf32> to vector<32x8xf32>
    %26 = arith.subf %8, %25 : vector<32x8xf32>
    %27 = arith.index_cast %16 : i32 to index
    %c0_11 = arith.constant 0 : index
    %c0_12 = arith.constant 0 : index
    %28 = vector.load %arg5[%27, %c0_11, %c0_12] : memref<8x32x32xf32, #tpu.memory_space<vmem>>, vector<1x32x32xf32>
    %29 = vector.shape_cast %28 : vector<1x32x32xf32> to vector<32x32xf32>
    %cst_13 = arith.constant dense<0.000000e+00> : vector<32x8xf32>
    %30 = tpu.matmul %29, %26, %cst_13 {dimension_numbers = #tpu.dot_dimension_numbers<[1], [0], [0], [1], [0, 0, 1, 1], [], []>} : vector<32x32xf32>, vector<32x8xf32>, vector<32x8xf32> -> vector<32x8xf32>
    %31 = arith.mulf %26, %30 : vector<32x8xf32>
    %cst_14 = arith.constant dense<0.000000e+00> : vector<8xf32>
    %32 = vector.multi_reduction <add>, %31, %cst_14 [0] : vector<32x8xf32> to vector<8xf32>
    %33 = vector.shape_cast %32 : vector<8xf32> to vector<1x8xf32>
    %34 = arith.index_cast %c0_i32_9 : i32 to index
    %c0_15 = arith.constant 0 : index
    %35 = vector.load %arg6[%34, %c0_15] : memref<8x8xf32, #tpu.memory_space<vmem>>, vector<1x8xf32>
    %36 = vector.broadcast %7 : f32 to vector<1x8xf32>
    %37 = arith.mulf %36, %33 : vector<1x8xf32>
    %38 = arith.addf %35, %37 : vector<1x8xf32>
    %39 = arith.mulf %9, %20 : vector<1x8xf32>
    %cst_16 = arith.constant dense<0.000000e+00> : vector<1xf32>
    %40 = vector.multi_reduction <add>, %39, %cst_16 [1] : vector<1x8xf32> to vector<1xf32>
    %41 = vector.shape_cast %40 : vector<1xf32> to vector<1x1xf32>
    %42 = vector.broadcast %41 : vector<1x1xf32> to vector<1x8xf32>
    %43 = arith.mulf %42, %20 : vector<1x8xf32>
    %44 = arith.subf %38, %43 : vector<1x8xf32>
    %cst_17 = arith.constant dense<0xFF800000> : vector<1xf32>
    %45 = vector.multi_reduction <maximumf>, %44, %cst_17 [1] : vector<1x8xf32> to vector<1xf32>
    %46 = vector.shape_cast %45 : vector<1xf32> to vector<1x1xf32>
    %47 = vector.broadcast %46 : vector<1x1xf32> to vector<1x8xf32>
    %48 = arith.subf %44, %47 : vector<1x8xf32>
    %49 = math.exp %48 : vector<1x8xf32>
    %cst_18 = arith.constant dense<0.000000e+00> : vector<1xf32>
    %50 = vector.multi_reduction <add>, %49, %cst_18 [1] : vector<1x8xf32> to vector<1xf32>
    %51 = vector.shape_cast %50 : vector<1xf32> to vector<1x1xf32>
    %52 = math.log %51 : vector<1x1xf32>
    %53 = arith.addf %46, %52 : vector<1x1xf32>
    %54 = arith.mulf %44, %20 : vector<1x8xf32>
    %cst_19 = arith.constant dense<0.000000e+00> : vector<1xf32>
    %55 = vector.multi_reduction <add>, %54, %cst_19 [1] : vector<1x8xf32> to vector<1xf32>
    %56 = vector.shape_cast %55 : vector<1xf32> to vector<1x1xf32>
    %57 = arith.subf %53, %56 : vector<1x1xf32>
    %58 = arith.mulf %10, %20 : vector<1x8xf32>
    %cst_20 = arith.constant dense<0.000000e+00> : vector<1xf32>
    %59 = vector.multi_reduction <add>, %58, %cst_20 [1] : vector<1x8xf32> to vector<1xf32>
    %60 = vector.shape_cast %59 : vector<1xf32> to vector<1x1xf32>
    %c16_i32 = arith.constant 16 : i32
    %61 = arith.cmpi slt, %14, %c16_i32 : i32
    %62 = arith.extui %61 : i1 to i32
    %63 = arith.sitofp %62 : i32 to f32
    %64 = vector.broadcast %63 : f32 to vector<1x1xf32>
    %65 = arith.mulf %60, %64 : vector<1x1xf32>
    %66 = arith.mulf %65, %57 : vector<1x1xf32>
    %67 = arith.addf %12, %66 : vector<1x1xf32>
    %68 = arith.addf %13, %65 : vector<1x1xf32>
    %c1_i32_21 = arith.constant 1 : i32
    %69 = arith.addi %2, %c1_i32_21 : i32
    %70 = arith.index_cast %69 : i32 to index
    %71 = memref.load %arg2[%70] : memref<16xi32, #tpu.memory_space<smem>>
    %72 = vector.broadcast %71 : i32 to vector<1x8xi32>
    %73 = arith.cmpi eq, %11, %72 : vector<1x8xi32>
    %74 = arith.extui %73 : vector<1x8xi1> to vector<1x8xi32>
    %75 = arith.sitofp %74 : vector<1x8xi32> to vector<1x8xf32>
    %76 = vector.broadcast %75 : vector<1x8xf32> to vector<32x8xf32>
    %77 = arith.mulf %8, %76 : vector<32x8xf32>
    %cst_22 = arith.constant dense<0.000000e+00> : vector<32xf32>
    %78 = vector.multi_reduction <add>, %77, %cst_22 [1] : vector<32x8xf32> to vector<32xf32>
    %79 = vector.shape_cast %78 : vector<32xf32> to vector<32x1xf32>
    %80 = vector.broadcast %79 : vector<32x1xf32> to vector<32x8xf32>
    %81 = arith.subf %8, %80 : vector<32x8xf32>
    %82 = arith.index_cast %71 : i32 to index
    %c0_23 = arith.constant 0 : index
    %c0_24 = arith.constant 0 : index
    %83 = vector.load %arg5[%82, %c0_23, %c0_24] : memref<8x32x32xf32, #tpu.memory_space<vmem>>, vector<1x32x32xf32>
    %84 = vector.shape_cast %83 : vector<1x32x32xf32> to vector<32x32xf32>
    %cst_25 = arith.constant dense<0.000000e+00> : vector<32x8xf32>
    %85 = tpu.matmul %84, %81, %cst_25 {dimension_numbers = #tpu.dot_dimension_numbers<[1], [0], [0], [1], [0, 0, 1, 1], [], []>} : vector<32x32xf32>, vector<32x8xf32>, vector<32x8xf32> -> vector<32x8xf32>
    %86 = arith.mulf %81, %85 : vector<32x8xf32>
    %cst_26 = arith.constant dense<0.000000e+00> : vector<8xf32>
    %87 = vector.multi_reduction <add>, %86, %cst_26 [0] : vector<32x8xf32> to vector<8xf32>
    %88 = vector.shape_cast %87 : vector<8xf32> to vector<1x8xf32>
    %89 = arith.index_cast %c1_i32_21 : i32 to index
    %c0_27 = arith.constant 0 : index
    %90 = vector.load %arg6[%89, %c0_27] : memref<8x8xf32, #tpu.memory_space<vmem>>, vector<1x8xf32>
    %91 = vector.broadcast %7 : f32 to vector<1x8xf32>
    %92 = arith.mulf %91, %88 : vector<1x8xf32>
    %93 = arith.addf %90, %92 : vector<1x8xf32>
    %94 = arith.mulf %9, %75 : vector<1x8xf32>
    %cst_28 = arith.constant dense<0.000000e+00> : vector<1xf32>
    %95 = vector.multi_reduction <add>, %94, %cst_28 [1] : vector<1x8xf32> to vector<1xf32>
    %96 = vector.shape_cast %95 : vector<1xf32> to vector<1x1xf32>
    %97 = vector.broadcast %96 : vector<1x1xf32> to vector<1x8xf32>
    %98 = arith.mulf %97, %75 : vector<1x8xf32>
    %99 = arith.subf %93, %98 : vector<1x8xf32>
    %cst_29 = arith.constant dense<0xFF800000> : vector<1xf32>
    %100 = vector.multi_reduction <maximumf>, %99, %cst_29 [1] : vector<1x8xf32> to vector<1xf32>
    %101 = vector.shape_cast %100 : vector<1xf32> to vector<1x1xf32>
    %102 = vector.broadcast %101 : vector<1x1xf32> to vector<1x8xf32>
    %103 = arith.subf %99, %102 : vector<1x8xf32>
    %104 = math.exp %103 : vector<1x8xf32>
    %cst_30 = arith.constant dense<0.000000e+00> : vector<1xf32>
    %105 = vector.multi_reduction <add>, %104, %cst_30 [1] : vector<1x8xf32> to vector<1xf32>
    %106 = vector.shape_cast %105 : vector<1xf32> to vector<1x1xf32>
    %107 = math.log %106 : vector<1x1xf32>
    %108 = arith.addf %101, %107 : vector<1x1xf32>
    %109 = arith.mulf %99, %75 : vector<1x8xf32>
    %cst_31 = arith.constant dense<0.000000e+00> : vector<1xf32>
    %110 = vector.multi_reduction <add>, %109, %cst_31 [1] : vector<1x8xf32> to vector<1xf32>
    %111 = vector.shape_cast %110 : vector<1xf32> to vector<1x1xf32>
    %112 = arith.subf %108, %111 : vector<1x1xf32>
    %113 = arith.mulf %10, %75 : vector<1x8xf32>
    %cst_32 = arith.constant dense<0.000000e+00> : vector<1xf32>
    %114 = vector.multi_reduction <add>, %113, %cst_32 [1] : vector<1x8xf32> to vector<1xf32>
    %115 = vector.shape_cast %114 : vector<1xf32> to vector<1x1xf32>
    %c16_i32_33 = arith.constant 16 : i32
    %116 = arith.cmpi slt, %69, %c16_i32_33 : i32
    %117 = arith.extui %116 : i1 to i32
    %118 = arith.sitofp %117 : i32 to f32
    %119 = vector.broadcast %118 : f32 to vector<1x1xf32>
    %120 = arith.mulf %115, %119 : vector<1x1xf32>
    %121 = arith.mulf %120, %112 : vector<1x1xf32>
    %122 = arith.addf %67, %121 : vector<1x1xf32>
    %123 = arith.addf %68, %120 : vector<1x1xf32>
    %c2_i32 = arith.constant 2 : i32
    %124 = arith.addi %2, %c2_i32 : i32
    %125 = arith.index_cast %124 : i32 to index
    %126 = memref.load %arg2[%125] : memref<16xi32, #tpu.memory_space<smem>>
    %127 = vector.broadcast %126 : i32 to vector<1x8xi32>
    %128 = arith.cmpi eq, %11, %127 : vector<1x8xi32>
    %129 = arith.extui %128 : vector<1x8xi1> to vector<1x8xi32>
    %130 = arith.sitofp %129 : vector<1x8xi32> to vector<1x8xf32>
    %131 = vector.broadcast %130 : vector<1x8xf32> to vector<32x8xf32>
    %132 = arith.mulf %8, %131 : vector<32x8xf32>
    %cst_34 = arith.constant dense<0.000000e+00> : vector<32xf32>
    %133 = vector.multi_reduction <add>, %132, %cst_34 [1] : vector<32x8xf32> to vector<32xf32>
    %134 = vector.shape_cast %133 : vector<32xf32> to vector<32x1xf32>
    %135 = vector.broadcast %134 : vector<32x1xf32> to vector<32x8xf32>
    %136 = arith.subf %8, %135 : vector<32x8xf32>
    %137 = arith.index_cast %126 : i32 to index
    %c0_35 = arith.constant 0 : index
    %c0_36 = arith.constant 0 : index
    %138 = vector.load %arg5[%137, %c0_35, %c0_36] : memref<8x32x32xf32, #tpu.memory_space<vmem>>, vector<1x32x32xf32>
    %139 = vector.shape_cast %138 : vector<1x32x32xf32> to vector<32x32xf32>
    %cst_37 = arith.constant dense<0.000000e+00> : vector<32x8xf32>
    %140 = tpu.matmul %139, %136, %cst_37 {dimension_numbers = #tpu.dot_dimension_numbers<[1], [0], [0], [1], [0, 0, 1, 1], [], []>} : vector<32x32xf32>, vector<32x8xf32>, vector<32x8xf32> -> vector<32x8xf32>
    %141 = arith.mulf %136, %140 : vector<32x8xf32>
    %cst_38 = arith.constant dense<0.000000e+00> : vector<8xf32>
    %142 = vector.multi_reduction <add>, %141, %cst_38 [0] : vector<32x8xf32> to vector<8xf32>
    %143 = vector.shape_cast %142 : vector<8xf32> to vector<1x8xf32>
    %144 = arith.index_cast %c2_i32 : i32 to index
    %c0_39 = arith.constant 0 : index
    %145 = vector.load %arg6[%144, %c0_39] : memref<8x8xf32, #tpu.memory_space<vmem>>, vector<1x8xf32>
    %146 = vector.broadcast %7 : f32 to vector<1x8xf32>
    %147 = arith.mulf %146, %143 : vector<1x8xf32>
    %148 = arith.addf %145, %147 : vector<1x8xf32>
    %149 = arith.mulf %9, %130 : vector<1x8xf32>
    %cst_40 = arith.constant dense<0.000000e+00> : vector<1xf32>
    %150 = vector.multi_reduction <add>, %149, %cst_40 [1] : vector<1x8xf32> to vector<1xf32>
    %151 = vector.shape_cast %150 : vector<1xf32> to vector<1x1xf32>
    %152 = vector.broadcast %151 : vector<1x1xf32> to vector<1x8xf32>
    %153 = arith.mulf %152, %130 : vector<1x8xf32>
    %154 = arith.subf %148, %153 : vector<1x8xf32>
    %cst_41 = arith.constant dense<0xFF800000> : vector<1xf32>
    %155 = vector.multi_reduction <maximumf>, %154, %cst_41 [1] : vector<1x8xf32> to vector<1xf32>
    %156 = vector.shape_cast %155 : vector<1xf32> to vector<1x1xf32>
    %157 = vector.broadcast %156 : vector<1x1xf32> to vector<1x8xf32>
    %158 = arith.subf %154, %157 : vector<1x8xf32>
    %159 = math.exp %158 : vector<1x8xf32>
    %cst_42 = arith.constant dense<0.000000e+00> : vector<1xf32>
    %160 = vector.multi_reduction <add>, %159, %cst_42 [1] : vector<1x8xf32> to vector<1xf32>
    %161 = vector.shape_cast %160 : vector<1xf32> to vector<1x1xf32>
    %162 = math.log %161 : vector<1x1xf32>
    %163 = arith.addf %156, %162 : vector<1x1xf32>
    %164 = arith.mulf %154, %130 : vector<1x8xf32>
    %cst_43 = arith.constant dense<0.000000e+00> : vector<1xf32>
    %165 = vector.multi_reduction <add>, %164, %cst_43 [1] : vector<1x8xf32> to vector<1xf32>
    %166 = vector.shape_cast %165 : vector<1xf32> to vector<1x1xf32>
    %167 = arith.subf %163, %166 : vector<1x1xf32>
    %168 = arith.mulf %10, %130 : vector<1x8xf32>
    %cst_44 = arith.constant dense<0.000000e+00> : vector<1xf32>
    %169 = vector.multi_reduction <add>, %168, %cst_44 [1] : vector<1x8xf32> to vector<1xf32>
    %170 = vector.shape_cast %169 : vector<1xf32> to vector<1x1xf32>
    %c16_i32_45 = arith.constant 16 : i32
    %171 = arith.cmpi slt, %124, %c16_i32_45 : i32
    %172 = arith.extui %171 : i1 to i32
    %173 = arith.sitofp %172 : i32 to f32
    %174 = vector.broadcast %173 : f32 to vector<1x1xf32>
    %175 = arith.mulf %170, %174 : vector<1x1xf32>
    %176 = arith.mulf %175, %167 : vector<1x1xf32>
    %177 = arith.addf %122, %176 : vector<1x1xf32>
    %178 = arith.addf %123, %175 : vector<1x1xf32>
    %c3_i32 = arith.constant 3 : i32
    %179 = arith.addi %2, %c3_i32 : i32
    %180 = arith.index_cast %179 : i32 to index
    %181 = memref.load %arg2[%180] : memref<16xi32, #tpu.memory_space<smem>>
    %182 = vector.broadcast %181 : i32 to vector<1x8xi32>
    %183 = arith.cmpi eq, %11, %182 : vector<1x8xi32>
    %184 = arith.extui %183 : vector<1x8xi1> to vector<1x8xi32>
    %185 = arith.sitofp %184 : vector<1x8xi32> to vector<1x8xf32>
    %186 = vector.broadcast %185 : vector<1x8xf32> to vector<32x8xf32>
    %187 = arith.mulf %8, %186 : vector<32x8xf32>
    %cst_46 = arith.constant dense<0.000000e+00> : vector<32xf32>
    %188 = vector.multi_reduction <add>, %187, %cst_46 [1] : vector<32x8xf32> to vector<32xf32>
    %189 = vector.shape_cast %188 : vector<32xf32> to vector<32x1xf32>
    %190 = vector.broadcast %189 : vector<32x1xf32> to vector<32x8xf32>
    %191 = arith.subf %8, %190 : vector<32x8xf32>
    %192 = arith.index_cast %181 : i32 to index
    %c0_47 = arith.constant 0 : index
    %c0_48 = arith.constant 0 : index
    %193 = vector.load %arg5[%192, %c0_47, %c0_48] : memref<8x32x32xf32, #tpu.memory_space<vmem>>, vector<1x32x32xf32>
    %194 = vector.shape_cast %193 : vector<1x32x32xf32> to vector<32x32xf32>
    %cst_49 = arith.constant dense<0.000000e+00> : vector<32x8xf32>
    %195 = tpu.matmul %194, %191, %cst_49 {dimension_numbers = #tpu.dot_dimension_numbers<[1], [0], [0], [1], [0, 0, 1, 1], [], []>} : vector<32x32xf32>, vector<32x8xf32>, vector<32x8xf32> -> vector<32x8xf32>
    %196 = arith.mulf %191, %195 : vector<32x8xf32>
    %cst_50 = arith.constant dense<0.000000e+00> : vector<8xf32>
    %197 = vector.multi_reduction <add>, %196, %cst_50 [0] : vector<32x8xf32> to vector<8xf32>
    %198 = vector.shape_cast %197 : vector<8xf32> to vector<1x8xf32>
    %199 = arith.index_cast %c3_i32 : i32 to index
    %c0_51 = arith.constant 0 : index
    %200 = vector.load %arg6[%199, %c0_51] : memref<8x8xf32, #tpu.memory_space<vmem>>, vector<1x8xf32>
    %201 = vector.broadcast %7 : f32 to vector<1x8xf32>
    %202 = arith.mulf %201, %198 : vector<1x8xf32>
    %203 = arith.addf %200, %202 : vector<1x8xf32>
    %204 = arith.mulf %9, %185 : vector<1x8xf32>
    %cst_52 = arith.constant dense<0.000000e+00> : vector<1xf32>
    %205 = vector.multi_reduction <add>, %204, %cst_52 [1] : vector<1x8xf32> to vector<1xf32>
    %206 = vector.shape_cast %205 : vector<1xf32> to vector<1x1xf32>
    %207 = vector.broadcast %206 : vector<1x1xf32> to vector<1x8xf32>
    %208 = arith.mulf %207, %185 : vector<1x8xf32>
    %209 = arith.subf %203, %208 : vector<1x8xf32>
    %cst_53 = arith.constant dense<0xFF800000> : vector<1xf32>
    %210 = vector.multi_reduction <maximumf>, %209, %cst_53 [1] : vector<1x8xf32> to vector<1xf32>
    %211 = vector.shape_cast %210 : vector<1xf32> to vector<1x1xf32>
    %212 = vector.broadcast %211 : vector<1x1xf32> to vector<1x8xf32>
    %213 = arith.subf %209, %212 : vector<1x8xf32>
    %214 = math.exp %213 : vector<1x8xf32>
    %cst_54 = arith.constant dense<0.000000e+00> : vector<1xf32>
    %215 = vector.multi_reduction <add>, %214, %cst_54 [1] : vector<1x8xf32> to vector<1xf32>
    %216 = vector.shape_cast %215 : vector<1xf32> to vector<1x1xf32>
    %217 = math.log %216 : vector<1x1xf32>
    %218 = arith.addf %211, %217 : vector<1x1xf32>
    %219 = arith.mulf %209, %185 : vector<1x8xf32>
    %cst_55 = arith.constant dense<0.000000e+00> : vector<1xf32>
    %220 = vector.multi_reduction <add>, %219, %cst_55 [1] : vector<1x8xf32> to vector<1xf32>
    %221 = vector.shape_cast %220 : vector<1xf32> to vector<1x1xf32>
    %222 = arith.subf %218, %221 : vector<1x1xf32>
    %223 = arith.mulf %10, %185 : vector<1x8xf32>
    %cst_56 = arith.constant dense<0.000000e+00> : vector<1xf32>
    %224 = vector.multi_reduction <add>, %223, %cst_56 [1] : vector<1x8xf32> to vector<1xf32>
    %225 = vector.shape_cast %224 : vector<1xf32> to vector<1x1xf32>
    %c16_i32_57 = arith.constant 16 : i32
    %226 = arith.cmpi slt, %179, %c16_i32_57 : i32
    %227 = arith.extui %226 : i1 to i32
    %228 = arith.sitofp %227 : i32 to f32
    %229 = vector.broadcast %228 : f32 to vector<1x1xf32>
    %230 = arith.mulf %225, %229 : vector<1x1xf32>
    %231 = arith.mulf %230, %222 : vector<1x1xf32>
    %232 = arith.addf %177, %231 : vector<1x1xf32>
    %233 = arith.addf %178, %230 : vector<1x1xf32>
    %c4_i32 = arith.constant 4 : i32
    %234 = arith.addi %2, %c4_i32 : i32
    %235 = arith.index_cast %234 : i32 to index
    %236 = memref.load %arg2[%235] : memref<16xi32, #tpu.memory_space<smem>>
    %237 = vector.broadcast %236 : i32 to vector<1x8xi32>
    %238 = arith.cmpi eq, %11, %237 : vector<1x8xi32>
    %239 = arith.extui %238 : vector<1x8xi1> to vector<1x8xi32>
    %240 = arith.sitofp %239 : vector<1x8xi32> to vector<1x8xf32>
    %241 = vector.broadcast %240 : vector<1x8xf32> to vector<32x8xf32>
    %242 = arith.mulf %8, %241 : vector<32x8xf32>
    %cst_58 = arith.constant dense<0.000000e+00> : vector<32xf32>
    %243 = vector.multi_reduction <add>, %242, %cst_58 [1] : vector<32x8xf32> to vector<32xf32>
    %244 = vector.shape_cast %243 : vector<32xf32> to vector<32x1xf32>
    %245 = vector.broadcast %244 : vector<32x1xf32> to vector<32x8xf32>
    %246 = arith.subf %8, %245 : vector<32x8xf32>
    %247 = arith.index_cast %236 : i32 to index
    %c0_59 = arith.constant 0 : index
    %c0_60 = arith.constant 0 : index
    %248 = vector.load %arg5[%247, %c0_59, %c0_60] : memref<8x32x32xf32, #tpu.memory_space<vmem>>, vector<1x32x32xf32>
    %249 = vector.shape_cast %248 : vector<1x32x32xf32> to vector<32x32xf32>
    %cst_61 = arith.constant dense<0.000000e+00> : vector<32x8xf32>
    %250 = tpu.matmul %249, %246, %cst_61 {dimension_numbers = #tpu.dot_dimension_numbers<[1], [0], [0], [1], [0, 0, 1, 1], [], []>} : vector<32x32xf32>, vector<32x8xf32>, vector<32x8xf32> -> vector<32x8xf32>
    %251 = arith.mulf %246, %250 : vector<32x8xf32>
    %cst_62 = arith.constant dense<0.000000e+00> : vector<8xf32>
    %252 = vector.multi_reduction <add>, %251, %cst_62 [0] : vector<32x8xf32> to vector<8xf32>
    %253 = vector.shape_cast %252 : vector<8xf32> to vector<1x8xf32>
    %254 = arith.index_cast %c4_i32 : i32 to index
    %c0_63 = arith.constant 0 : index
    %255 = vector.load %arg6[%254, %c0_63] : memref<8x8xf32, #tpu.memory_space<vmem>>, vector<1x8xf32>
    %256 = vector.broadcast %7 : f32 to vector<1x8xf32>
    %257 = arith.mulf %256, %253 : vector<1x8xf32>
    %258 = arith.addf %255, %257 : vector<1x8xf32>
    %259 = arith.mulf %9, %240 : vector<1x8xf32>
    %cst_64 = arith.constant dense<0.000000e+00> : vector<1xf32>
    %260 = vector.multi_reduction <add>, %259, %cst_64 [1] : vector<1x8xf32> to vector<1xf32>
    %261 = vector.shape_cast %260 : vector<1xf32> to vector<1x1xf32>
    %262 = vector.broadcast %261 : vector<1x1xf32> to vector<1x8xf32>
    %263 = arith.mulf %262, %240 : vector<1x8xf32>
    %264 = arith.subf %258, %263 : vector<1x8xf32>
    %cst_65 = arith.constant dense<0xFF800000> : vector<1xf32>
    %265 = vector.multi_reduction <maximumf>, %264, %cst_65 [1] : vector<1x8xf32> to vector<1xf32>
    %266 = vector.shape_cast %265 : vector<1xf32> to vector<1x1xf32>
    %267 = vector.broadcast %266 : vector<1x1xf32> to vector<1x8xf32>
    %268 = arith.subf %264, %267 : vector<1x8xf32>
    %269 = math.exp %268 : vector<1x8xf32>
    %cst_66 = arith.constant dense<0.000000e+00> : vector<1xf32>
    %270 = vector.multi_reduction <add>, %269, %cst_66 [1] : vector<1x8xf32> to vector<1xf32>
    %271 = vector.shape_cast %270 : vector<1xf32> to vector<1x1xf32>
    %272 = math.log %271 : vector<1x1xf32>
    %273 = arith.addf %266, %272 : vector<1x1xf32>
    %274 = arith.mulf %264, %240 : vector<1x8xf32>
    %cst_67 = arith.constant dense<0.000000e+00> : vector<1xf32>
    %275 = vector.multi_reduction <add>, %274, %cst_67 [1] : vector<1x8xf32> to vector<1xf32>
    %276 = vector.shape_cast %275 : vector<1xf32> to vector<1x1xf32>
    %277 = arith.subf %273, %276 : vector<1x1xf32>
    %278 = arith.mulf %10, %240 : vector<1x8xf32>
    %cst_68 = arith.constant dense<0.000000e+00> : vector<1xf32>
    %279 = vector.multi_reduction <add>, %278, %cst_68 [1] : vector<1x8xf32> to vector<1xf32>
    %280 = vector.shape_cast %279 : vector<1xf32> to vector<1x1xf32>
    %c16_i32_69 = arith.constant 16 : i32
    %281 = arith.cmpi slt, %234, %c16_i32_69 : i32
    %282 = arith.extui %281 : i1 to i32
    %283 = arith.sitofp %282 : i32 to f32
    %284 = vector.broadcast %283 : f32 to vector<1x1xf32>
    %285 = arith.mulf %280, %284 : vector<1x1xf32>
    %286 = arith.mulf %285, %277 : vector<1x1xf32>
    %287 = arith.addf %232, %286 : vector<1x1xf32>
    %288 = arith.addf %233, %285 : vector<1x1xf32>
    %c5_i32 = arith.constant 5 : i32
    %289 = arith.addi %2, %c5_i32 : i32
    %290 = arith.index_cast %289 : i32 to index
    %291 = memref.load %arg2[%290] : memref<16xi32, #tpu.memory_space<smem>>
    %292 = vector.broadcast %291 : i32 to vector<1x8xi32>
    %293 = arith.cmpi eq, %11, %292 : vector<1x8xi32>
    %294 = arith.extui %293 : vector<1x8xi1> to vector<1x8xi32>
    %295 = arith.sitofp %294 : vector<1x8xi32> to vector<1x8xf32>
    %296 = vector.broadcast %295 : vector<1x8xf32> to vector<32x8xf32>
    %297 = arith.mulf %8, %296 : vector<32x8xf32>
    %cst_70 = arith.constant dense<0.000000e+00> : vector<32xf32>
    %298 = vector.multi_reduction <add>, %297, %cst_70 [1] : vector<32x8xf32> to vector<32xf32>
    %299 = vector.shape_cast %298 : vector<32xf32> to vector<32x1xf32>
    %300 = vector.broadcast %299 : vector<32x1xf32> to vector<32x8xf32>
    %301 = arith.subf %8, %300 : vector<32x8xf32>
    %302 = arith.index_cast %291 : i32 to index
    %c0_71 = arith.constant 0 : index
    %c0_72 = arith.constant 0 : index
    %303 = vector.load %arg5[%302, %c0_71, %c0_72] : memref<8x32x32xf32, #tpu.memory_space<vmem>>, vector<1x32x32xf32>
    %304 = vector.shape_cast %303 : vector<1x32x32xf32> to vector<32x32xf32>
    %cst_73 = arith.constant dense<0.000000e+00> : vector<32x8xf32>
    %305 = tpu.matmul %304, %301, %cst_73 {dimension_numbers = #tpu.dot_dimension_numbers<[1], [0], [0], [1], [0, 0, 1, 1], [], []>} : vector<32x32xf32>, vector<32x8xf32>, vector<32x8xf32> -> vector<32x8xf32>
    %306 = arith.mulf %301, %305 : vector<32x8xf32>
    %cst_74 = arith.constant dense<0.000000e+00> : vector<8xf32>
    %307 = vector.multi_reduction <add>, %306, %cst_74 [0] : vector<32x8xf32> to vector<8xf32>
    %308 = vector.shape_cast %307 : vector<8xf32> to vector<1x8xf32>
    %309 = arith.index_cast %c5_i32 : i32 to index
    %c0_75 = arith.constant 0 : index
    %310 = vector.load %arg6[%309, %c0_75] : memref<8x8xf32, #tpu.memory_space<vmem>>, vector<1x8xf32>
    %311 = vector.broadcast %7 : f32 to vector<1x8xf32>
    %312 = arith.mulf %311, %308 : vector<1x8xf32>
    %313 = arith.addf %310, %312 : vector<1x8xf32>
    %314 = arith.mulf %9, %295 : vector<1x8xf32>
    %cst_76 = arith.constant dense<0.000000e+00> : vector<1xf32>
    %315 = vector.multi_reduction <add>, %314, %cst_76 [1] : vector<1x8xf32> to vector<1xf32>
    %316 = vector.shape_cast %315 : vector<1xf32> to vector<1x1xf32>
    %317 = vector.broadcast %316 : vector<1x1xf32> to vector<1x8xf32>
    %318 = arith.mulf %317, %295 : vector<1x8xf32>
    %319 = arith.subf %313, %318 : vector<1x8xf32>
    %cst_77 = arith.constant dense<0xFF800000> : vector<1xf32>
    %320 = vector.multi_reduction <maximumf>, %319, %cst_77 [1] : vector<1x8xf32> to vector<1xf32>
    %321 = vector.shape_cast %320 : vector<1xf32> to vector<1x1xf32>
    %322 = vector.broadcast %321 : vector<1x1xf32> to vector<1x8xf32>
    %323 = arith.subf %319, %322 : vector<1x8xf32>
    %324 = math.exp %323 : vector<1x8xf32>
    %cst_78 = arith.constant dense<0.000000e+00> : vector<1xf32>
    %325 = vector.multi_reduction <add>, %324, %cst_78 [1] : vector<1x8xf32> to vector<1xf32>
    %326 = vector.shape_cast %325 : vector<1xf32> to vector<1x1xf32>
    %327 = math.log %326 : vector<1x1xf32>
    %328 = arith.addf %321, %327 : vector<1x1xf32>
    %329 = arith.mulf %319, %295 : vector<1x8xf32>
    %cst_79 = arith.constant dense<0.000000e+00> : vector<1xf32>
    %330 = vector.multi_reduction <add>, %329, %cst_79 [1] : vector<1x8xf32> to vector<1xf32>
    %331 = vector.shape_cast %330 : vector<1xf32> to vector<1x1xf32>
    %332 = arith.subf %328, %331 : vector<1x1xf32>
    %333 = arith.mulf %10, %295 : vector<1x8xf32>
    %cst_80 = arith.constant dense<0.000000e+00> : vector<1xf32>
    %334 = vector.multi_reduction <add>, %333, %cst_80 [1] : vector<1x8xf32> to vector<1xf32>
    %335 = vector.shape_cast %334 : vector<1xf32> to vector<1x1xf32>
    %c16_i32_81 = arith.constant 16 : i32
    %336 = arith.cmpi slt, %289, %c16_i32_81 : i32
    %337 = arith.extui %336 : i1 to i32
    %338 = arith.sitofp %337 : i32 to f32
    %339 = vector.broadcast %338 : f32 to vector<1x1xf32>
    %340 = arith.mulf %335, %339 : vector<1x1xf32>
    %341 = arith.mulf %340, %332 : vector<1x1xf32>
    %342 = arith.addf %287, %341 : vector<1x1xf32>
    %343 = arith.addf %288, %340 : vector<1x1xf32>
    %c6_i32 = arith.constant 6 : i32
    %344 = arith.addi %2, %c6_i32 : i32
    %345 = arith.index_cast %344 : i32 to index
    %346 = memref.load %arg2[%345] : memref<16xi32, #tpu.memory_space<smem>>
    %347 = vector.broadcast %346 : i32 to vector<1x8xi32>
    %348 = arith.cmpi eq, %11, %347 : vector<1x8xi32>
    %349 = arith.extui %348 : vector<1x8xi1> to vector<1x8xi32>
    %350 = arith.sitofp %349 : vector<1x8xi32> to vector<1x8xf32>
    %351 = vector.broadcast %350 : vector<1x8xf32> to vector<32x8xf32>
    %352 = arith.mulf %8, %351 : vector<32x8xf32>
    %cst_82 = arith.constant dense<0.000000e+00> : vector<32xf32>
    %353 = vector.multi_reduction <add>, %352, %cst_82 [1] : vector<32x8xf32> to vector<32xf32>
    %354 = vector.shape_cast %353 : vector<32xf32> to vector<32x1xf32>
    %355 = vector.broadcast %354 : vector<32x1xf32> to vector<32x8xf32>
    %356 = arith.subf %8, %355 : vector<32x8xf32>
    %357 = arith.index_cast %346 : i32 to index
    %c0_83 = arith.constant 0 : index
    %c0_84 = arith.constant 0 : index
    %358 = vector.load %arg5[%357, %c0_83, %c0_84] : memref<8x32x32xf32, #tpu.memory_space<vmem>>, vector<1x32x32xf32>
    %359 = vector.shape_cast %358 : vector<1x32x32xf32> to vector<32x32xf32>
    %cst_85 = arith.constant dense<0.000000e+00> : vector<32x8xf32>
    %360 = tpu.matmul %359, %356, %cst_85 {dimension_numbers = #tpu.dot_dimension_numbers<[1], [0], [0], [1], [0, 0, 1, 1], [], []>} : vector<32x32xf32>, vector<32x8xf32>, vector<32x8xf32> -> vector<32x8xf32>
    %361 = arith.mulf %356, %360 : vector<32x8xf32>
    %cst_86 = arith.constant dense<0.000000e+00> : vector<8xf32>
    %362 = vector.multi_reduction <add>, %361, %cst_86 [0] : vector<32x8xf32> to vector<8xf32>
    %363 = vector.shape_cast %362 : vector<8xf32> to vector<1x8xf32>
    %364 = arith.index_cast %c6_i32 : i32 to index
    %c0_87 = arith.constant 0 : index
    %365 = vector.load %arg6[%364, %c0_87] : memref<8x8xf32, #tpu.memory_space<vmem>>, vector<1x8xf32>
    %366 = vector.broadcast %7 : f32 to vector<1x8xf32>
    %367 = arith.mulf %366, %363 : vector<1x8xf32>
    %368 = arith.addf %365, %367 : vector<1x8xf32>
    %369 = arith.mulf %9, %350 : vector<1x8xf32>
    %cst_88 = arith.constant dense<0.000000e+00> : vector<1xf32>
    %370 = vector.multi_reduction <add>, %369, %cst_88 [1] : vector<1x8xf32> to vector<1xf32>
    %371 = vector.shape_cast %370 : vector<1xf32> to vector<1x1xf32>
    %372 = vector.broadcast %371 : vector<1x1xf32> to vector<1x8xf32>
    %373 = arith.mulf %372, %350 : vector<1x8xf32>
    %374 = arith.subf %368, %373 : vector<1x8xf32>
    %cst_89 = arith.constant dense<0xFF800000> : vector<1xf32>
    %375 = vector.multi_reduction <maximumf>, %374, %cst_89 [1] : vector<1x8xf32> to vector<1xf32>
    %376 = vector.shape_cast %375 : vector<1xf32> to vector<1x1xf32>
    %377 = vector.broadcast %376 : vector<1x1xf32> to vector<1x8xf32>
    %378 = arith.subf %374, %377 : vector<1x8xf32>
    %379 = math.exp %378 : vector<1x8xf32>
    %cst_90 = arith.constant dense<0.000000e+00> : vector<1xf32>
    %380 = vector.multi_reduction <add>, %379, %cst_90 [1] : vector<1x8xf32> to vector<1xf32>
    %381 = vector.shape_cast %380 : vector<1xf32> to vector<1x1xf32>
    %382 = math.log %381 : vector<1x1xf32>
    %383 = arith.addf %376, %382 : vector<1x1xf32>
    %384 = arith.mulf %374, %350 : vector<1x8xf32>
    %cst_91 = arith.constant dense<0.000000e+00> : vector<1xf32>
    %385 = vector.multi_reduction <add>, %384, %cst_91 [1] : vector<1x8xf32> to vector<1xf32>
    %386 = vector.shape_cast %385 : vector<1xf32> to vector<1x1xf32>
    %387 = arith.subf %383, %386 : vector<1x1xf32>
    %388 = arith.mulf %10, %350 : vector<1x8xf32>
    %cst_92 = arith.constant dense<0.000000e+00> : vector<1xf32>
    %389 = vector.multi_reduction <add>, %388, %cst_92 [1] : vector<1x8xf32> to vector<1xf32>
    %390 = vector.shape_cast %389 : vector<1xf32> to vector<1x1xf32>
    %c16_i32_93 = arith.constant 16 : i32
    %391 = arith.cmpi slt, %344, %c16_i32_93 : i32
    %392 = arith.extui %391 : i1 to i32
    %393 = arith.sitofp %392 : i32 to f32
    %394 = vector.broadcast %393 : f32 to vector<1x1xf32>
    %395 = arith.mulf %390, %394 : vector<1x1xf32>
    %396 = arith.mulf %395, %387 : vector<1x1xf32>
    %397 = arith.addf %342, %396 : vector<1x1xf32>
    %398 = arith.addf %343, %395 : vector<1x1xf32>
    %c7_i32 = arith.constant 7 : i32
    %399 = arith.addi %2, %c7_i32 : i32
    %400 = arith.index_cast %399 : i32 to index
    %401 = memref.load %arg2[%400] : memref<16xi32, #tpu.memory_space<smem>>
    %402 = vector.broadcast %401 : i32 to vector<1x8xi32>
    %403 = arith.cmpi eq, %11, %402 : vector<1x8xi32>
    %404 = arith.extui %403 : vector<1x8xi1> to vector<1x8xi32>
    %405 = arith.sitofp %404 : vector<1x8xi32> to vector<1x8xf32>
    %406 = vector.broadcast %405 : vector<1x8xf32> to vector<32x8xf32>
    %407 = arith.mulf %8, %406 : vector<32x8xf32>
    %cst_94 = arith.constant dense<0.000000e+00> : vector<32xf32>
    %408 = vector.multi_reduction <add>, %407, %cst_94 [1] : vector<32x8xf32> to vector<32xf32>
    %409 = vector.shape_cast %408 : vector<32xf32> to vector<32x1xf32>
    %410 = vector.broadcast %409 : vector<32x1xf32> to vector<32x8xf32>
    %411 = arith.subf %8, %410 : vector<32x8xf32>
    %412 = arith.index_cast %401 : i32 to index
    %c0_95 = arith.constant 0 : index
    %c0_96 = arith.constant 0 : index
    %413 = vector.load %arg5[%412, %c0_95, %c0_96] : memref<8x32x32xf32, #tpu.memory_space<vmem>>, vector<1x32x32xf32>
    %414 = vector.shape_cast %413 : vector<1x32x32xf32> to vector<32x32xf32>
    %cst_97 = arith.constant dense<0.000000e+00> : vector<32x8xf32>
    %415 = tpu.matmul %414, %411, %cst_97 {dimension_numbers = #tpu.dot_dimension_numbers<[1], [0], [0], [1], [0, 0, 1, 1], [], []>} : vector<32x32xf32>, vector<32x8xf32>, vector<32x8xf32> -> vector<32x8xf32>
    %416 = arith.mulf %411, %415 : vector<32x8xf32>
    %cst_98 = arith.constant dense<0.000000e+00> : vector<8xf32>
    %417 = vector.multi_reduction <add>, %416, %cst_98 [0] : vector<32x8xf32> to vector<8xf32>
    %418 = vector.shape_cast %417 : vector<8xf32> to vector<1x8xf32>
    %419 = arith.index_cast %c7_i32 : i32 to index
    %c0_99 = arith.constant 0 : index
    %420 = vector.load %arg6[%419, %c0_99] : memref<8x8xf32, #tpu.memory_space<vmem>>, vector<1x8xf32>
    %421 = vector.broadcast %7 : f32 to vector<1x8xf32>
    %422 = arith.mulf %421, %418 : vector<1x8xf32>
    %423 = arith.addf %420, %422 : vector<1x8xf32>
    %424 = arith.mulf %9, %405 : vector<1x8xf32>
    %cst_100 = arith.constant dense<0.000000e+00> : vector<1xf32>
    %425 = vector.multi_reduction <add>, %424, %cst_100 [1] : vector<1x8xf32> to vector<1xf32>
    %426 = vector.shape_cast %425 : vector<1xf32> to vector<1x1xf32>
    %427 = vector.broadcast %426 : vector<1x1xf32> to vector<1x8xf32>
    %428 = arith.mulf %427, %405 : vector<1x8xf32>
    %429 = arith.subf %423, %428 : vector<1x8xf32>
    %cst_101 = arith.constant dense<0xFF800000> : vector<1xf32>
    %430 = vector.multi_reduction <maximumf>, %429, %cst_101 [1] : vector<1x8xf32> to vector<1xf32>
    %431 = vector.shape_cast %430 : vector<1xf32> to vector<1x1xf32>
    %432 = vector.broadcast %431 : vector<1x1xf32> to vector<1x8xf32>
    %433 = arith.subf %429, %432 : vector<1x8xf32>
    %434 = math.exp %433 : vector<1x8xf32>
    %cst_102 = arith.constant dense<0.000000e+00> : vector<1xf32>
    %435 = vector.multi_reduction <add>, %434, %cst_102 [1] : vector<1x8xf32> to vector<1xf32>
    %436 = vector.shape_cast %435 : vector<1xf32> to vector<1x1xf32>
    %437 = math.log %436 : vector<1x1xf32>
    %438 = arith.addf %431, %437 : vector<1x1xf32>
    %439 = arith.mulf %429, %405 : vector<1x8xf32>
    %cst_103 = arith.constant dense<0.000000e+00> : vector<1xf32>
    %440 = vector.multi_reduction <add>, %439, %cst_103 [1] : vector<1x8xf32> to vector<1xf32>
    %441 = vector.shape_cast %440 : vector<1xf32> to vector<1x1xf32>
    %442 = arith.subf %438, %441 : vector<1x1xf32>
    %443 = arith.mulf %10, %405 : vector<1x8xf32>
    %cst_104 = arith.constant dense<0.000000e+00> : vector<1xf32>
    %444 = vector.multi_reduction <add>, %443, %cst_104 [1] : vector<1x8xf32> to vector<1xf32>
    %445 = vector.shape_cast %444 : vector<1xf32> to vector<1x1xf32>
    %c16_i32_105 = arith.constant 16 : i32
    %446 = arith.cmpi slt, %399, %c16_i32_105 : i32
    %447 = arith.extui %446 : i1 to i32
    %448 = arith.sitofp %447 : i32 to f32
    %449 = vector.broadcast %448 : f32 to vector<1x1xf32>
    %450 = arith.mulf %445, %449 : vector<1x1xf32>
    %451 = arith.mulf %450, %442 : vector<1x1xf32>
    %452 = arith.addf %397, %451 : vector<1x1xf32>
    %453 = arith.addf %398, %450 : vector<1x1xf32>
    %c8_i32_106 = arith.constant 8 : i32
    %c0_107 = arith.constant 0 : index
    %c0_108 = arith.constant 0 : index
    %454 = vector.load %arg10[%c0_107, %c0_108] : memref<1x1xf32, #tpu.memory_space<vmem>>, vector<1x1xf32>
    %455 = arith.addf %454, %452 : vector<1x1xf32>
    %c0_109 = arith.constant 0 : index
    %c0_110 = arith.constant 0 : index
    %456 = vector.load %arg10[%c0_109, %c0_110] : memref<1x1xf32, #tpu.memory_space<vmem>>, vector<1x1xf32>
    tpu.vector_store %arg10[%c0_109, %c0_110], %455 {strides = array<i32>} : memref<1x1xf32, #tpu.memory_space<vmem>>, vector<1x1xf32>,
    %c0_111 = arith.constant 0 : index
    %c0_112 = arith.constant 0 : index
    %457 = vector.load %arg11[%c0_111, %c0_112] : memref<1x1xf32, #tpu.memory_space<vmem>>, vector<1x1xf32>
    %458 = arith.addf %457, %453 : vector<1x1xf32>
    %c0_113 = arith.constant 0 : index
    %c0_114 = arith.constant 0 : index
    %459 = vector.load %arg11[%c0_113, %c0_114] : memref<1x1xf32, #tpu.memory_space<vmem>>, vector<1x1xf32>
    tpu.vector_store %arg11[%c0_113, %c0_114], %458 {strides = array<i32>} : memref<1x1xf32, #tpu.memory_space<vmem>>, vector<1x1xf32>,
    %c0_i32_115 = arith.constant 0 : i32
    %460 = arith.cmpi eq, %arg1, %c0_i32_115 : i32
    %461 = arith.extui %460 : i1 to i32
    %c0_i32_116 = arith.constant 0 : i32
    %462 = arith.cmpi ne, %461, %c0_i32_116 : i32
    scf.if %462 {
      %463 = tpu.iota {dimensions = array<i32: 0>} : vector<8x128xi32>
      %464 = tpu.iota {dimensions = array<i32: 1>} : vector<8x128xi32>
      %c0_117 = arith.constant 0 : index
      %c0_118 = arith.constant 0 : index
      %465 = vector.load %arg10[%c0_117, %c0_118] : memref<1x1xf32, #tpu.memory_space<vmem>>, vector<1x1xf32>
      %466 = vector.shape_cast %465 : vector<1x1xf32> to vector<1x1xf32>
      %467 = vector.broadcast %466 : vector<1x1xf32> to vector<8x128xf32>
      %c0_119 = arith.constant 0 : index
      %c0_120 = arith.constant 0 : index
      %468 = vector.load %arg11[%c0_119, %c0_120] : memref<1x1xf32, #tpu.memory_space<vmem>>, vector<1x1xf32>
      %469 = vector.shape_cast %468 : vector<1x1xf32> to vector<1x1xf32>
      %470 = vector.broadcast %469 : vector<1x1xf32> to vector<8x128xf32>
      %c0_i32_121 = arith.constant 0 : i32
      %471 = vector.broadcast %c0_i32_121 : i32 to vector<8x128xi32>
      %472 = arith.cmpi eq, %463, %471 : vector<8x128xi32>
      %c0_i32_122 = arith.constant 0 : i32
      %473 = vector.broadcast %c0_i32_122 : i32 to vector<8x128xi32>
      %474 = arith.cmpi eq, %464, %473 : vector<8x128xi32>
      %475 = arith.andi %472, %474 : vector<8x128xi1>
      %c0_i32_123 = arith.constant 0 : i32
      %476 = vector.broadcast %c0_i32_123 : i32 to vector<8x128xi32>
      %477 = arith.cmpi eq, %463, %476 : vector<8x128xi32>
      %c1_i32_124 = arith.constant 1 : i32
      %478 = vector.broadcast %c1_i32_124 : i32 to vector<8x128xi32>
      %479 = arith.cmpi eq, %464, %478 : vector<8x128xi32>
      %480 = arith.andi %477, %479 : vector<8x128xi1>
      %cst_125 = arith.constant 0.000000e+00 : f32
      %481 = vector.broadcast %cst_125 : f32 to vector<8x128xf32>
      %482 = arith.select %480, %470, %481 : vector<8x128xi1>, vector<8x128xf32>
      %483 = arith.select %475, %467, %482 : vector<8x128xi1>, vector<8x128xf32>
      %c0_126 = arith.constant 0 : index
      %c0_127 = arith.constant 0 : index
      %484 = vector.load %arg9[%c0_126, %c0_127] : memref<8x128xf32, #tpu.memory_space<vmem>>, vector<8x128xf32>
      tpu.vector_store %arg9[%c0_126, %c0_127], %483 {strides = array<i32>} : memref<8x128xf32, #tpu.memory_space<vmem>>, vector<8x128xf32>,
    } else {
    }
    return
  }
  func.func @transform_0(%arg0: i32, %arg1: i32, %arg2: memref<16xi32, #tpu.memory_space<smem>>) -> i32 {
    %c0_i32 = arith.constant 0 : i32
    %c0_i32_0 = arith.constant 0 : i32
    return %c0_i32 : i32
  }
  func.func @transform_1(%arg0: i32, %arg1: i32, %arg2: memref<16xi32, #tpu.memory_space<smem>>) -> (i32, i32) {
    %c0_i32 = arith.constant 0 : i32
    %c0_i32_0 = arith.constant 0 : i32
    %c0_i32_1 = arith.constant 0 : i32
    return %c0_i32, %c0_i32_0 : i32, i32
  }
  func.func @transform_2(%arg0: i32, %arg1: i32, %arg2: memref<16xi32, #tpu.memory_space<smem>>) -> (i32, i32, i32) {
    %c0_i32 = arith.constant 0 : i32
    %c0_i32_0 = arith.constant 0 : i32
    %c0_i32_1 = arith.constant 0 : i32
    %c0_i32_2 = arith.constant 0 : i32
    return %c0_i32, %c0_i32_0, %c0_i32_1 : i32, i32, i32
  }
  func.func @transform_3(%arg0: i32, %arg1: i32, %arg2: memref<16xi32, #tpu.memory_space<smem>>) -> (i32, i32) {
    %c1_i32 = arith.constant 1 : i32
    %0 = arith.muli %arg0, %c1_i32 : i32
    %1 = arith.addi %0, %arg1 : i32
    %c0_i32 = arith.constant 0 : i32
    %c0_i32_0 = arith.constant 0 : i32
    return %1, %c0_i32 : i32, i32
  }
  func.func @transform_4(%arg0: i32, %arg1: i32, %arg2: memref<16xi32, #tpu.memory_space<smem>>) -> (i32, i32) {
    %c0_i32 = arith.constant 0 : i32
    %c0_i32_0 = arith.constant 0 : i32
    %c0_i32_1 = arith.constant 0 : i32
    return %c0_i32, %c0_i32_0 : i32, i32
  }
  func.func @transform_5(%arg0: i32, %arg1: i32, %arg2: memref<16xi32, #tpu.memory_space<smem>>) -> (i32, i32) {
    %c0_i32 = arith.constant 0 : i32
    %c0_i32_0 = arith.constant 0 : i32
    %c0_i32_1 = arith.constant 0 : i32
    return %c0_i32, %c0_i32_0 : i32, i32
  }
  func.func @transform_6(%arg0: i32, %arg1: i32, %arg2: memref<16xi32, #tpu.memory_space<smem>>) -> (i32, i32) {
    %c0_i32 = arith.constant 0 : i32
    %c0_i32_0 = arith.constant 0 : i32
    return %arg0, %c0_i32 : i32, i32
  }
}

</mosaic_0001>

<llo_original>
// kernel: tpu_custom_call.1
$region0: #{tpu_custom_call.1}
  #allocation0 [shape = 'u32[]', space=smem, size = 0x4, offset = 0x4, fixed_abs, tag = 'smem constant byte address 0x4 - core index']
  #allocation1 [shape = 'u32[72,128]{1,0:T(1,128)}', space=vmem, size = 0x9000, scoped, tag = 'internal scratch']
  #allocation2 [shape = 'f32[1,1]{1,0:T(1,128)}', space=vmem, size = 0x200, scoped, tag = 'scratch operand']
  #allocation3 [shape = 'f32[1,1]{1,0:T(1,128)}', space=vmem, size = 0x200, scoped, tag = 'scratch operand']
  #allocation4 [shape = 's32[1]{0}', space=sflag, size = 0x4, scoped, tag = 'scoped memory for tpu_custom_call.1']
  #allocation5 [shape = 'u8[512]{0}', space=smem, size = 0x200, scoped, tag = 'prefetched SMEM operand 0']
  #allocation6 [shape = 'f32[1]{0:T(128)S(6)}', space=smem, size = 0x200, scoped, tag = 'scoped memory for tpu_custom_call.1']
  %s0 = inlined_call_operand.vmem [shape: s32[16], index: 0, kind: input, shape index: {}]
  %s1 = inlined_call_operand.<no memory space> [shape: f32[1], index: 1, kind: input, shape index: {}]
  %s2 = inlined_call_operand.vmem [shape: f32[32,8], index: 2, kind: input, shape index: {}]
  %s3 = inlined_call_operand.hbm [shape: f32[8,32,32], index: 3, kind: input, shape index: {}]
  %s4 = inlined_call_operand.vmem [shape: f32[16,8], index: 4, kind: input, shape index: {}]
  %s5 = inlined_call_operand.vmem [shape: f32[1,8], index: 5, kind: input, shape index: {}]
  %s6 = inlined_call_operand.vmem [shape: f32[1,8], index: 6, kind: input, shape index: {}]
  %s7 = inlined_call_operand.hbm [shape: f32[16,128], index: 7, kind: output, shape index: {}]
  %s8 = sld [smem:[#allocation0]]
  $region69: #{tpu_custom_call.1} parent=0
    _
  %s10 = ssub.s32 1, %s8
  %s11 = scalar_select 0, %s10, %s8
  %s13 = sshll.u32 %s0, 4
  %s14 = int_to_ptr.vmem [resolvable:$true] %s13
  %16 = dma.vmem_to_smem %s14, 16, [#allocation5], [#allocation4]
  %17 = sst [smem:[#allocation6]] %s1
  %19 = dma.done [#allocation4], 16
  %20 = sfence
  $region1: #{tpu_custom_call.1} parent=0
    #allocation7 [shape = 'u8[131072]{0}', space=vmem, size = 0x20000, scoped, tag = 'input window, operand 3, single buffered']
    #allocation8 [shape = 's32[2]{0}', space=sflag, size = 0x8, scoped, tag = 'scoped memory for tpu_custom_call.1']
    #allocation9 [shape = 's32[2]{0}', space=sflag, size = 0x8, scoped, tag = 'scoped memory for tpu_custom_call.1']
    #allocation10 [shape = 'u8[8192]{0}', space=vmem, size = 0x2000, scoped, tag = 'output window, operand 0']
    %21 = vsyncpa [#allocation8], 0
    %22 = vsyncpa [#allocation9], 0
    %s23 = scalar_lea.sflag [#allocation9], 1
    %24 = vsyncpa %s23, 0
    loop: start=0, step=1, limit=4
    $region2: #{tpu_custom_call.1} parent=1 // loop_pre_header
      _
    $region3: #{tpu_custom_call.1} parent=1 // loop_header
      %s26 = sphi 0, %s30
      %p27 = scmp.ge.s32.totalorder %s26, 4
      %s33 = sphi 0, %s45
      %s34 = sphi 0, %s41
      %s35 = sphi 0, %s33
      %s36 = sphi 0, %s34
      %s37 = sphi 0, %s35
      %s38 = sphi 0, %s36
      %s46 = sphi 0, %s46
      %s48 = sphi 0, %s46
      %s49 = sphi 0, %s48
      %s63 = sphi 0, %s49
      %s67 = sphi 0, %s67
      %s69 = sphi 0, %s67
      %s70 = sphi 0, %s69
      %s84 = sphi 0, %s70
      %s88 = sphi 0, %s88
      %s90 = sphi 0, %s88
      %s91 = sphi 0, %s90
      %s105 = sphi 0, %s91
      %s113 = sphi 0, %s115
      %s116 = sphi 0, %s113
      %s117 = sphi 0, %s116
      %s133 = sphi 0, %s117
      %s137 = sphi 0, %s137
      %s139 = sphi 0, %s137
      %s140 = sphi 0, %s139
      %s154 = sphi 0, %s140
      %s158 = sphi 0, %s158
      %s160 = sphi 0, %s158
      %s161 = sphi 0, %s160
      %s175 = sphi 0, %s161
      %s181 = sphi 0, %s183
      %s184 = sphi 0, %s181
      %s185 = sphi 0, %s184
      %s201 = sphi 0, %s185
    $region4: #{tpu_custom_call.1} parent=1 // loop_header_branch
      %29 = sbr.rel (%p27) target = $region8
    $region5: #{tpu_custom_call.1} parent=1 // loop_body
      %s31 = ssub.s32 %s26, 1
      %s32 = ssub.s32 %s26, 2
      %s39 = sadd.s32 1, %s34
      %p40 = scmp.ge.s32.totalorder %s39, 1
      %s41 = scalar_select %p40, 0, %s39
      %s42 = sadd.s32 1, %s33
      %s43 = scalar_select %p40, %s42, %s33
      %p44 = scmp.ge.s32.totalorder %s43, 2
      %s45 = scalar_select %p44, 0, %s43
      %s47 = sadd.s32 %s46, 1
      %p50 = scmp.eq.s32.totalorder %s26, 1
      %p51 = scmp.ne.s32.totalorder %s46, %s48
      %p52 = scmp.eq.s32.totalorder %s26, 0
      %p53 = por %p51, %p52
      %p54 = scmp.ne.s32.totalorder %s46, %s48
      %p55 = scmp.eq.s32.totalorder %s31, 1
      %p56 = por %p54, %p55
      %p57 = scmp.ne.s32.totalorder %s48, %s49
      %p58 = scmp.eq.s32.totalorder %s31, 0
      %p59 = por %p57, %p58
      %p60 = scmp.ne.s32.totalorder %s48, %s49
      %p61 = scmp.eq.s32.totalorder %s32, 1
      %p62 = por %p60, %p61
      %p64 = scmp.ne.s32.totalorder %s49, %s63
      %p65 = scmp.eq.s32.totalorder %s32, 0
      %p66 = por %p64, %p65
      %s68 = sadd.s32 %s67, 1
      %p71 = scmp.eq.s32.totalorder %s26, 1
      %p72 = scmp.ne.s32.totalorder %s67, %s69
      %p73 = scmp.eq.s32.totalorder %s26, 0
      %p74 = por %p72, %p73
      %p75 = scmp.ne.s32.totalorder %s67, %s69
      %p76 = scmp.eq.s32.totalorder %s31, 1
      %p77 = por %p75, %p76
      %p78 = scmp.ne.s32.totalorder %s69, %s70
      %p79 = scmp.eq.s32.totalorder %s31, 0
      %p80 = por %p78, %p79
      %p81 = scmp.ne.s32.totalorder %s69, %s70
      %p82 = scmp.eq.s32.totalorder %s32, 1
      %p83 = por %p81, %p82
      %p85 = scmp.ne.s32.totalorder %s70, %s84
      %p86 = scmp.eq.s32.totalorder %s32, 0
      %p87 = por %p85, %p86
      %s89 = sadd.s32 %s88, 1
      %p92 = scmp.eq.s32.totalorder %s26, 1
      %p93 = scmp.ne.s32.totalorder %s88, %s90
      %p94 = scmp.eq.s32.totalorder %s26, 0
      %p95 = por %p93, %p94
      %p96 = scmp.ne.s32.totalorder %s88, %s90
      %p97 = scmp.eq.s32.totalorder %s31, 1
      %p98 = por %p96, %p97
      %p99 = scmp.ne.s32.totalorder %s90, %s91
      %p100 = scmp.eq.s32.totalorder %s31, 0
      %p101 = por %p99, %p100
      %p102 = scmp.ne.s32.totalorder %s90, %s91
      %p103 = scmp.eq.s32.totalorder %s32, 1
      %p104 = por %p102, %p103
      %p106 = scmp.ne.s32.totalorder %s91, %s105
      %p107 = scmp.eq.s32.totalorder %s32, 0
      %p108 = por %p106, %p107
      %s109 = sadd.s32 %s33, %s34
      %s110 = sadd.s32 %s45, %s41
      %s111 = ssub.s32 %s109, %s110
      %p112 = scmp.eq.s32.totalorder %s111, 0
      %s114 = sadd.s32 %s113, 1
      %s115 = scalar_select %p112, %s113, %s114
      %p118 = pneg %p112
      %p119 = scmp.eq.s32.totalorder %s26, 1
      %p120 = por %p118, %p119
      %p121 = scmp.ne.s32.totalorder %s113, %s116
      %p122 = scmp.eq.s32.totalorder %s26, 0
      %p123 = por %p121, %p122
      %p124 = scmp.ne.s32.totalorder %s113, %s116
      %p125 = scmp.eq.s32.totalorder %s31, 1
      %p126 = por %p124, %p125
      %p127 = scmp.ne.s32.totalorder %s116, %s117
      %p128 = scmp.eq.s32.totalorder %s31, 0
      %p129 = por %p127, %p128
      %p130 = scmp.ne.s32.totalorder %s116, %s117
      %p131 = scmp.eq.s32.totalorder %s32, 1
      %p132 = por %p130, %p131
      %p134 = scmp.ne.s32.totalorder %s117, %s133
      %p135 = scmp.eq.s32.totalorder %s32, 0
      %p136 = por %p134, %p135
      %s138 = sadd.s32 %s137, 1
      %p141 = scmp.eq.s32.totalorder %s26, 1
      %p142 = scmp.ne.s32.totalorder %s137, %s139
      %p143 = scmp.eq.s32.totalorder %s26, 0
      %p144 = por %p142, %p143
      %p145 = scmp.ne.s32.totalorder %s137, %s139
      %p146 = scmp.eq.s32.totalorder %s31, 1
      %p147 = por %p145, %p146
      %p148 = scmp.ne.s32.totalorder %s139, %s140
      %p149 = scmp.eq.s32.totalorder %s31, 0
      %p150 = por %p148, %p149
      %p151 = scmp.ne.s32.totalorder %s139, %s140
      %p152 = scmp.eq.s32.totalorder %s32, 1
      %p153 = por %p151, %p152
      %p155 = scmp.ne.s32.totalorder %s140, %s154
      %p156 = scmp.eq.s32.totalorder %s32, 0
      %p157 = por %p155, %p156
      %s159 = sadd.s32 %s158, 1
      %p162 = scmp.eq.s32.totalorder %s26, 1
      %p163 = scmp.ne.s32.totalorder %s158, %s160
      %p164 = scmp.eq.s32.totalorder %s26, 0
      %p165 = por %p163, %p164
      %p166 = scmp.ne.s32.totalorder %s158, %s160
      %p167 = scmp.eq.s32.totalorder %s31, 1
      %p168 = por %p166, %p167
      %p169 = scmp.ne.s32.totalorder %s160, %s161
      %p170 = scmp.eq.s32.totalorder %s31, 0
      %p171 = por %p169, %p170
      %p172 = scmp.ne.s32.totalorder %s160, %s161
      %p173 = scmp.eq.s32.totalorder %s32, 1
      %p174 = por %p172, %p173
      %p176 = scmp.ne.s32.totalorder %s161, %s175
      %p177 = scmp.eq.s32.totalorder %s32, 0
      %p178 = por %p176, %p177
      %s179 = ssub.s32 %s33, %s45
      %p180 = scmp.eq.s32.totalorder %s179, 0
      %s182 = sadd.s32 %s181, 1
      %s183 = scalar_select %p180, %s181, %s182
      %p186 = pneg %p180
      %p187 = scmp.eq.s32.totalorder %s26, 1
      %p188 = por %p186, %p187
      %p189 = scmp.ne.s32.totalorder %s181, %s184
      %p190 = scmp.eq.s32.totalorder %s26, 0
      %p191 = por %p189, %p190
      %p192 = scmp.ne.s32.totalorder %s181, %s184
      %p193 = scmp.eq.s32.totalorder %s31, 1
      %p194 = por %p192, %p193
      %p195 = scmp.ne.s32.totalorder %s184, %s185
      %p196 = scmp.eq.s32.totalorder %s31, 0
      %p197 = por %p195, %p196
      %p198 = scmp.ne.s32.totalorder %s184, %s185
      %p199 = scmp.eq.s32.totalorder %s32, 1
      %p200 = por %p198, %p199
      %p202 = scmp.ne.s32.totalorder %s185, %s201
      %p203 = scmp.eq.s32.totalorder %s32, 0
      %p204 = por %p202, %p203
      %p205 = scmp.le.s32.totalorder 1, %s26
      %p206 = scmp.lt.s32.totalorder %s26, 3
      %p207 = pnand %p205, %p206
      %p208 = pneg %p207
      // Predicated region
      $region9: #{tpu_custom_call.1} parent=5 // pred_check
        _
      $region10: #{tpu_custom_call.1} parent=5 // pred_check_branch
        %210 = sbr.rel (%p207) target = $region12
      $region11: #{tpu_custom_call.1} parent=5 // pred_region
        %s211 = ssub.s32 %s26, 1
        // Predicated region
        $region13: #{tpu_custom_call.1} parent=11 // pred_check
          %p212 = pneg %p59
        $region14: #{tpu_custom_call.1} parent=11 // pred_check_branch
          %214 = sbr.rel (%p212) target = $region16
        $region15: #{tpu_custom_call.1} parent=11 // pred_region
          _
        $region16: #{tpu_custom_call.1} parent=11 // pred_fallthru
          _
        // Predicated region
        $region17: #{tpu_custom_call.1} parent=11 // pred_check
          %p215 = pneg %p80
        $region18: #{tpu_custom_call.1} parent=11 // pred_check_branch
          %217 = sbr.rel (%p215) target = $region20
        $region19: #{tpu_custom_call.1} parent=11 // pred_region
          _
        $region20: #{tpu_custom_call.1} parent=11 // pred_fallthru
          _
        // Predicated region
        $region21: #{tpu_custom_call.1} parent=11 // pred_check
          %p218 = pneg %p101
        $region22: #{tpu_custom_call.1} parent=11 // pred_check_branch
          %220 = sbr.rel (%p218) target = $region24
        $region23: #{tpu_custom_call.1} parent=11 // pred_region
          %222 = vsyncadd [#allocation8], 0
          %s223 = sshll.u32 %s3, 4
          %s224 = int_to_ptr.hbm [resolvable:$true] %s223
          %s225 = sshll.u32 [#allocation7], 4
          %s226 = int_to_ptr.vmem [resolvable:$true] %s225
          %231 = dma.hbm_to_vmem [thread:$0]  %s224, 4096, %s226, [#allocation8], 128, 128, 8
        $region24: #{tpu_custom_call.1} parent=11 // pred_fallthru
          _
        // Predicated region
        $region25: #{tpu_custom_call.1} parent=11 // pred_check
          %p232 = pneg %p150
        $region26: #{tpu_custom_call.1} parent=11 // pred_check_branch
          %234 = sbr.rel (%p232) target = $region28
        $region27: #{tpu_custom_call.1} parent=11 // pred_region
          _
        $region28: #{tpu_custom_call.1} parent=11 // pred_fallthru
          _
        // Predicated region
        $region29: #{tpu_custom_call.1} parent=11 // pred_check
          %p235 = pneg %p171
        $region30: #{tpu_custom_call.1} parent=11 // pred_check_branch
          %237 = sbr.rel (%p235) target = $region32
        $region31: #{tpu_custom_call.1} parent=11 // pred_region
          _
        $region32: #{tpu_custom_call.1} parent=11 // pred_fallthru
          _
      $region12: #{tpu_custom_call.1} parent=5 // pred_fallthru
        _
      %p238 = scmp.lt.s32.totalorder %s26, 2
      // Predicated region
      $region33: #{tpu_custom_call.1} parent=5 // pred_check
        %p239 = pneg %p238
      $region34: #{tpu_custom_call.1} parent=5 // pred_check_branch
        %241 = sbr.rel (%p239) target = $region36
      $region35: #{tpu_custom_call.1} parent=5 // pred_region
        // Predicated region
        $region37: #{tpu_custom_call.1} parent=35 // pred_check
          %p242 = pneg %p123
        $region38: #{tpu_custom_call.1} parent=35 // pred_check_branch
          %244 = sbr.rel (%p242) target = $region40
        $region39: #{tpu_custom_call.1} parent=35 // pred_region
          %s245 = sadd.s32 %s33, %s34
          %p246 = scmp.lt.s32.totalorder %s245, 1
          %s247 = scalar_select %p246, %s245, 1
          %s248 = smul.addr %s247, 8
          %s249 = scalar_lea.vmem %s4, %s248
          %s250 = sadd.s32 %s33, %s34
        $region40: #{tpu_custom_call.1} parent=35 // pred_fallthru
          _
      $region36: #{tpu_custom_call.1} parent=5 // pred_fallthru
        _
      %p251 = scmp.le.s32.totalorder 1, %s26
      %p252 = scmp.lt.s32.totalorder %s26, 3
      %p253 = pnand %p251, %p252
      %p254 = pneg %p253
      // Predicated region
      $region41: #{tpu_custom_call.1} parent=5 // pred_check
        _
      $region42: #{tpu_custom_call.1} parent=5 // pred_check_branch
        %256 = sbr.rel (%p253) target = $region44
      $region43: #{tpu_custom_call.1} parent=5 // pred_region
        %s257 = ssub.s32 %s26, 1
        // Predicated region
        $region45: #{tpu_custom_call.1} parent=43 // pred_check
          %p258 = pneg %p101
        $region46: #{tpu_custom_call.1} parent=43 // pred_check_branch
          %260 = sbr.rel (%p258) target = $region48
        $region47: #{tpu_custom_call.1} parent=43 // pred_region
          %262 = dma.done [#allocation8], 4096
        $region48: #{tpu_custom_call.1} parent=43 // pred_fallthru
          _
        %p263 = pneg %p59
        %p264 = pneg %p56
        %p265 = pneg %p80
        %p266 = pneg %p77
        %p267 = pneg %p101
        %p268 = pneg %p98
        %s269 = sadd.s32 %s35, %s36
        %p270 = scmp.lt.s32.totalorder %s269, 1
        %s271 = scalar_select %p270, %s269, 1
        %s272 = smul.addr %s271, 8
        %s273 = scalar_lea.vmem %s4, %s272
        %p274 = pneg %p129
        %p275 = pneg %p126
        %p276 = pneg %p150
        %p277 = pneg %p147
        %p278 = pneg %p171
        %p279 = pneg %p168
        %p280 = pneg %p197
        %p281 = pneg %p194
        %s282 = sand.u32 %s184, 1
        %s283 = scalar_lea.sflag [#allocation9], %s282
        %s284 = sand.u32 %s184, 1
        %s285 = smul.addr %s284, 8
        %s286 = scalar_lea.vmem [#allocation10], %s285
        %s287 = sadd.s32 %s35, %s36
        %p288 = scmp.lt.s32.totalorder %s287, 1
        %s289 = scalar_select %p288, %s287, 1
        %s290 = smul.addr %s289, 8
        %s291 = scalar_lea.vmem %s4, %s290
        %s292 = sadd.s32 %s35, %s36
        %s293 = sadd.s32 %s35, %s36
        %s294 = smul.u32 %s293, 8
        %p295 = scmp.eq.s32.totalorder %s36, 0
        // Predicated region
        $region49: #{tpu_custom_call.1} parent=43 // pred_check
          %p296 = pneg %p295
        $region50: #{tpu_custom_call.1} parent=43 // pred_check_branch
          %298 = sbr.rel (%p296) target = $region52
        $region51: #{tpu_custom_call.1} parent=43 // pred_region
          %vm299 = vcmask 0
          %300 = vst.msk [vmem:[#allocation2] sm:$0x1] %vm299, 0.0
          %301 = vst.msk [vmem:[#allocation3] sm:$0x1] %vm299, 0.0
        $region52: #{tpu_custom_call.1} parent=43 // pred_fallthru
          _
        %s302 = sld [smem:[#allocation6]]
        %s303 = smul.f32 %s302, 0.5
        %v304 = vld [vmem:[%s2] sm:$0xff]
        %v305 = vld [vmem:[%s2 + $0x8] sm:$0xff]
        %v306 = vld [vmem:[%s2 + $0x10] sm:$0xff]
        %v307 = vld [vmem:[%s2 + $0x18] sm:$0xff]
        %v308 = vld [vmem:[%s5] sm:$0x1]
        %v309 = vld [vmem:[%s6] sm:$0x1]
        %v310 = vlaneseq
        %v311 = vand.u32 %v310, 127
        %s312 = sld [smem:[#allocation5 + %s294]]
        %v313 = vstv %s312
        %vm314 = vcmp.eq.s32.totalorder %v311, %v313
        %v315 = vsel %vm314, 1, 0
        %v316 = vcvt.s32.f32 %v315
        %v317 = vmul.f32 %v304, %v316
        %v318 = vmul.f32 %v305, %v316
        %v319 = vmul.f32 %v306, %v316
        %v320 = vmul.f32 %v307, %v316
        %vm321 = vcmask 64512
        %v322 = vsel %vm321, %v317, 0.0
        %323 = vadd.xlane.f32.xlu0 %v322
        %v324 = vpop.xlane.xlu0 %323
        %v325 = vsel %vm321, %v318, 0.0
        %326 = vadd.xlane.f32.xlu0 %v325
        %v327 = vpop.xlane.xlu0 %326
        %v328 = vsel %vm321, %v319, 0.0
        %329 = vadd.xlane.f32.xlu0 %v328
        %v330 = vpop.xlane.xlu0 %329
        %v331 = vsel %vm321, %v320, 0.0
        %332 = vadd.xlane.f32.xlu0 %v331
        %v333 = vpop.xlane.xlu0 %332
        %v334 = vsub.f32 %v304, %v324
        %v335 = vsub.f32 %v305, %v327
        %v336 = vsub.f32 %v306, %v330
        %v337 = vsub.f32 %v307, %v333
        %s338 = smul.u32 %s312, 32
        %s339 = scalar_lea.vmem [#allocation7], %s338
        %v340 = vld [vmem:[%s339] sm:$0xff]
        %v341 = vld [vmem:[%s339 + $0x8] sm:$0xff]
        %v342 = vld [vmem:[%s339 + $0x10] sm:$0xff]
        %v343 = vld [vmem:[%s339 + $0x18] sm:$0xff]
        %vm344 = vcmask 261120
        %v346 = vsel %vm344, %v340, 0
        %v349 = vsel %vm344, %v341, 0
        %v352 = vsel %vm344, %v342, 0
        %v355 = vsel %vm344, %v343, 0
        %357 = vmatpush.msra.mxu0 0.0
        %358 = vmatpush.msra.mxu0 0.0
        %359 = vmatpush.msra.mxu0 0.0
        %360 = vmatpush.msra.mxu0 0.0
        %361 = vmatpush.msra.mxu0 0.0
        %362 = vmatpush.msra.mxu0 0.0
        %363 = vmatpush.msra.mxu0 0.0
        %364 = vmatpush.msra.mxu0 0.0
        %365 = vmatpush.msra.mxu0 0.0
        %366 = vmatpush.msra.mxu0 0.0
        %367 = vmatpush.msra.mxu0 0.0
        %368 = vmatpush.msra.mxu0 0.0
        %369 = vmatpush.msra.mxu0 %v337
        %370 = vmatpush.msra.mxu0 %v336
        %371 = vmatpush.msra.mxu0 %v335
        %372 = vmatpush.msra.mxu0 %v334
        %373 = vmatmul.f32.gmra.mxu0 %v346
        %v374 = vpop.f32.mrf.mxu0
        %v375 = vadd.f32 0.0, %v374
        %376 = vmatmul.f32.gmra.mxu0 %v349
        %v377 = vpop.f32.mrf.mxu0
        %v378 = vadd.f32 0.0, %v377
        %379 = vmatmul.f32.gmra.mxu0 %v352
        %v380 = vpop.f32.mrf.mxu0
        %v381 = vadd.f32 0.0, %v380
        %382 = vmatmul.f32.gmra.mxu0 %v355
        %v383 = vpop.f32.mrf.mxu0
        %v384 = vadd.f32 0.0, %v383
        %385 = vdwg.mxu0
        %v386 = vmul.f32 %v334, %v375
        %v387 = vmul.f32 %v335, %v378
        %v388 = vmul.f32 %v336, %v381
        %v389 = vmul.f32 %v337, %v384
        %v390 = vsel %vm321, %v386, 0.0
        %v391 = vsel %vm321, %v387, 0.0
        %v392 = vadd.f32 %v390, %v391
        %v393 = vsel %vm321, %v388, 0.0
        %v394 = vadd.f32 %v392, %v393
        %v395 = vsel %vm321, %v389, 0.0
        %v396 = vadd.f32 %v394, %v395
        %v397 = vrot.slane %v396, 4
        %v398 = vadd.f32 %v396, %v397
        %v399 = vrot.slane %v398, 2
        %v400 = vadd.f32 %v398, %v399
        %v401 = vrot.slane %v400, 1
        %v402 = vadd.f32 %v400, %v401
        %v403 = vld [vmem:[%s291] sm:$0x1]
        %v404 = vstv %s303
        %v405 = vmul.f32 %v404, %v402
        %v406 = vadd.f32 %v403, %v405
        %v407 = vmul.f32 %v308, %v316
        %vm408 = vcmask 57344
        %v409 = vsel %vm408, %v407, 0.0
        %410 = vadd.xlane.f32.xlu0 %v409
        %v411 = vpop.xlane.xlu0 %410
        %v412 = vmul.f32 %v411, %v316
        %v413 = vsub.f32 %v406, %v412
        %v414 = vsel %vm408, %v413, -inf
        %415 = vmax.xlane.f32.xlu0 %v414
        %v416 = vpop.xlane.xlu0 %415
        %v417 = vsub.f32 %v413, %v416
        %v418 = vmul.f32 %v417, 1.442695
        %v419 = vpow.pop %v418
        %v420 = vsel %vm408, %v419, 0.0
        %421 = vadd.xlane.f32.xlu0 %v420
        %v422 = vpop.xlane.xlu0 %421
        %v423 = vlog2.pop %v422
        %v424 = vmul.f32 %v423, 0.6931472
        %v425 = vadd.f32 %v416, %v424
        %v426 = vmul.f32 %v413, %v316
        %v427 = vsel %vm408, %v426, 0.0
        %428 = vadd.xlane.f32.xlu0 %v427
        %v429 = vpop.xlane.xlu0 %428
        %v430 = vsub.f32 %v425, %v429
        %v431 = vmul.f32 %v309, %v316
        %v432 = vsel %vm408, %v431, 0.0
        %433 = vadd.xlane.f32.xlu0 %v432
        %v434 = vpop.xlane.xlu0 %433
        %p435 = scmp.lt.s32.totalorder %s294, 16
        %s436 = scalar_select %p435, 1, 0
        %s437 = scvt.s32.f32 %s436
        %v438 = vstv %s437
        %v439 = vmul.f32 %v434, %v438
        %v440 = vmul.f32 %v439, %v430
        %v441 = vadd.f32 %v440, 0.0
        %v442 = vadd.f32 %v439, 0.0
        %s443 = sadd.s32 %s294, 1
        %s444 = sld [smem:[#allocation5 + %s443]]
        %v445 = vstv %s444
        %vm446 = vcmp.eq.s32.totalorder %v311, %v445
        %v447 = vsel %vm446, 1, 0
        %v448 = vcvt.s32.f32 %v447
        %v449 = vmul.f32 %v304, %v448
        %v450 = vmul.f32 %v305, %v448
        %v451 = vmul.f32 %v306, %v448
        %v452 = vmul.f32 %v307, %v448
        %v453 = vsel %vm321, %v449, 0.0
        %454 = vadd.xlane.f32.xlu0 %v453
        %v455 = vpop.xlane.xlu0 %454
        %v456 = vsel %vm321, %v450, 0.0
        %457 = vadd.xlane.f32.xlu0 %v456
        %v458 = vpop.xlane.xlu0 %457
        %v459 = vsel %vm321, %v451, 0.0
        %460 = vadd.xlane.f32.xlu0 %v459
        %v461 = vpop.xlane.xlu0 %460
        %v462 = vsel %vm321, %v452, 0.0
        %463 = vadd.xlane.f32.xlu0 %v462
        %v464 = vpop.xlane.xlu0 %463
        %v465 = vsub.f32 %v304, %v455
        %v466 = vsub.f32 %v305, %v458
        %v467 = vsub.f32 %v306, %v461
        %v468 = vsub.f32 %v307, %v464
        %s469 = smul.u32 %s444, 32
        %s470 = scalar_lea.vmem [#allocation7], %s469
        %v471 = vld [vmem:[%s470] sm:$0xff]
        %v472 = vld [vmem:[%s470 + $0x8] sm:$0xff]
        %v473 = vld [vmem:[%s470 + $0x10] sm:$0xff]
        %v474 = vld [vmem:[%s470 + $0x18] sm:$0xff]
        %v476 = vsel %vm344, %v471, 0
        %v479 = vsel %vm344, %v472, 0
        %v482 = vsel %vm344, %v473, 0
        %v485 = vsel %vm344, %v474, 0
        %487 = vmatpush.msra.mxu0 0.0
        %488 = vmatpush.msra.mxu0 0.0
        %489 = vmatpush.msra.mxu0 0.0
        %490 = vmatpush.msra.mxu0 0.0
        %491 = vmatpush.msra.mxu0 0.0
        %492 = vmatpush.msra.mxu0 0.0
        %493 = vmatpush.msra.mxu0 0.0
        %494 = vmatpush.msra.mxu0 0.0
        %495 = vmatpush.msra.mxu0 0.0
        %496 = vmatpush.msra.mxu0 0.0
        %497 = vmatpush.msra.mxu0 0.0
        %498 = vmatpush.msra.mxu0 0.0
        %499 = vmatpush.msra.mxu0 %v468
        %500 = vmatpush.msra.mxu0 %v467
        %501 = vmatpush.msra.mxu0 %v466
        %502 = vmatpush.msra.mxu0 %v465
        %503 = vmatmul.f32.gmra.mxu0 %v476
        %v504 = vpop.f32.mrf.mxu0
        %v505 = vadd.f32 0.0, %v504
        %506 = vmatmul.f32.gmra.mxu0 %v479
        %v507 = vpop.f32.mrf.mxu0
        %v508 = vadd.f32 0.0, %v507
        %509 = vmatmul.f32.gmra.mxu0 %v482
        %v510 = vpop.f32.mrf.mxu0
        %v511 = vadd.f32 0.0, %v510
        %512 = vmatmul.f32.gmra.mxu0 %v485
        %v513 = vpop.f32.mrf.mxu0
        %v514 = vadd.f32 0.0, %v513
        %515 = vdwg.mxu0
        %v516 = vmul.f32 %v465, %v505
        %v517 = vmul.f32 %v466, %v508
        %v518 = vmul.f32 %v467, %v511
        %v519 = vmul.f32 %v468, %v514
        %v520 = vsel %vm321, %v516, 0.0
        %v521 = vsel %vm321, %v517, 0.0
        %v522 = vadd.f32 %v520, %v521
        %v523 = vsel %vm321, %v518, 0.0
        %v524 = vadd.f32 %v522, %v523
        %v525 = vsel %vm321, %v519, 0.0
        %v526 = vadd.f32 %v524, %v525
        %v527 = vrot.slane %v526, 4
        %v528 = vadd.f32 %v526, %v527
        %v529 = vrot.slane %v528, 2
        %v530 = vadd.f32 %v528, %v529
        %v531 = vrot.slane %v530, 1
        %v532 = vadd.f32 %v530, %v531
        %v533 = vld [vmem:[%s291 + $0x1] sm:$0x1]
        %v534 = vmul.f32 %v404, %v532
        %v535 = vadd.f32 %v533, %v534
        %v536 = vmul.f32 %v308, %v448
        %v537 = vsel %vm408, %v536, 0.0
        %538 = vadd.xlane.f32.xlu0 %v537
        %v539 = vpop.xlane.xlu0 %538
        %v540 = vmul.f32 %v539, %v448
        %v541 = vsub.f32 %v535, %v540
        %v542 = vsel %vm408, %v541, -inf
        %543 = vmax.xlane.f32.xlu0 %v542
        %v544 = vpop.xlane.xlu0 %543
        %v545 = vsub.f32 %v541, %v544
        %v546 = vmul.f32 %v545, 1.442695
        %v547 = vpow.pop %v546
        %v548 = vsel %vm408, %v547, 0.0
        %549 = vadd.xlane.f32.xlu0 %v548
        %v550 = vpop.xlane.xlu0 %549
        %v551 = vlog2.pop %v550
        %v552 = vmul.f32 %v551, 0.6931472
        %v553 = vadd.f32 %v544, %v552
        %v554 = vmul.f32 %v541, %v448
        %v555 = vsel %vm408, %v554, 0.0
        %556 = vadd.xlane.f32.xlu0 %v555
        %v557 = vpop.xlane.xlu0 %556
        %v558 = vsub.f32 %v553, %v557
        %v559 = vmul.f32 %v309, %v448
        %v560 = vsel %vm408, %v559, 0.0
        %561 = vadd.xlane.f32.xlu0 %v560
        %v562 = vpop.xlane.xlu0 %561
        %p563 = scmp.lt.s32.totalorder %s443, 16
        %s564 = scalar_select %p563, 1, 0
        %s565 = scvt.s32.f32 %s564
        %v566 = vstv %s565
        %v567 = vmul.f32 %v562, %v566
        %v568 = vmul.f32 %v567, %v558
        %v569 = vadd.f32 %v441, %v568
        %v570 = vadd.f32 %v442, %v567
        %s571 = sadd.s32 %s294, 2
        %s572 = sld [smem:[#allocation5 + %s571]]
        %v573 = vstv %s572
        %vm574 = vcmp.eq.s32.totalorder %v311, %v573
        %v575 = vsel %vm574, 1, 0
        %v576 = vcvt.s32.f32 %v575
        %v577 = vmul.f32 %v304, %v576
        %v578 = vmul.f32 %v305, %v576
        %v579 = vmul.f32 %v306, %v576
        %v580 = vmul.f32 %v307, %v576
        %v581 = vsel %vm321, %v577, 0.0
        %582 = vadd.xlane.f32.xlu0 %v581
        %v583 = vpop.xlane.xlu0 %582
        %v584 = vsel %vm321, %v578, 0.0
        %585 = vadd.xlane.f32.xlu0 %v584
        %v586 = vpop.xlane.xlu0 %585
        %v587 = vsel %vm321, %v579, 0.0
        %588 = vadd.xlane.f32.xlu0 %v587
        %v589 = vpop.xlane.xlu0 %588
        %v590 = vsel %vm321, %v580, 0.0
        %591 = vadd.xlane.f32.xlu0 %v590
        %v592 = vpop.xlane.xlu0 %591
        %v593 = vsub.f32 %v304, %v583
        %v594 = vsub.f32 %v305, %v586
        %v595 = vsub.f32 %v306, %v589
        %v596 = vsub.f32 %v307, %v592
        %s597 = smul.u32 %s572, 32
        %s598 = scalar_lea.vmem [#allocation7], %s597
        %v599 = vld [vmem:[%s598] sm:$0xff]
        %v600 = vld [vmem:[%s598 + $0x8] sm:$0xff]
        %v601 = vld [vmem:[%s598 + $0x10] sm:$0xff]
        %v602 = vld [vmem:[%s598 + $0x18] sm:$0xff]
        %v604 = vsel %vm344, %v599, 0
        %v607 = vsel %vm344, %v600, 0
        %v610 = vsel %vm344, %v601, 0
        %v613 = vsel %vm344, %v602, 0
        %615 = vmatpush.msra.mxu0 0.0
        %616 = vmatpush.msra.mxu0 0.0
        %617 = vmatpush.msra.mxu0 0.0
        %618 = vmatpush.msra.mxu0 0.0
        %619 = vmatpush.msra.mxu0 0.0
        %620 = vmatpush.msra.mxu0 0.0
        %621 = vmatpush.msra.mxu0 0.0
        %622 = vmatpush.msra.mxu0 0.0
        %623 = vmatpush.msra.mxu0 0.0
        %624 = vmatpush.msra.mxu0 0.0
        %625 = vmatpush.msra.mxu0 0.0
        %626 = vmatpush.msra.mxu0 0.0
        %627 = vmatpush.msra.mxu0 %v596
        %628 = vmatpush.msra.mxu0 %v595
        %629 = vmatpush.msra.mxu0 %v594
        %630 = vmatpush.msra.mxu0 %v593
        %631 = vmatmul.f32.gmra.mxu0 %v604
        %v632 = vpop.f32.mrf.mxu0
        %v633 = vadd.f32 0.0, %v632
        %634 = vmatmul.f32.gmra.mxu0 %v607
        %v635 = vpop.f32.mrf.mxu0
        %v636 = vadd.f32 0.0, %v635
        %637 = vmatmul.f32.gmra.mxu0 %v610
        %v638 = vpop.f32.mrf.mxu0
        %v639 = vadd.f32 0.0, %v638
        %640 = vmatmul.f32.gmra.mxu0 %v613
        %v641 = vpop.f32.mrf.mxu0
        %v642 = vadd.f32 0.0, %v641
        %643 = vdwg.mxu0
        %v644 = vmul.f32 %v593, %v633
        %v645 = vmul.f32 %v594, %v636
        %v646 = vmul.f32 %v595, %v639
        %v647 = vmul.f32 %v596, %v642
        %v648 = vsel %vm321, %v644, 0.0
        %v649 = vsel %vm321, %v645, 0.0
        %v650 = vadd.f32 %v648, %v649
        %v651 = vsel %vm321, %v646, 0.0
        %v652 = vadd.f32 %v650, %v651
        %v653 = vsel %vm321, %v647, 0.0
        %v654 = vadd.f32 %v652, %v653
        %v655 = vrot.slane %v654, 4
        %v656 = vadd.f32 %v654, %v655
        %v657 = vrot.slane %v656, 2
        %v658 = vadd.f32 %v656, %v657
        %v659 = vrot.slane %v658, 1
        %v660 = vadd.f32 %v658, %v659
        %v661 = vld [vmem:[%s291 + $0x2] sm:$0x1]
        %v662 = vmul.f32 %v404, %v660
        %v663 = vadd.f32 %v661, %v662
        %v664 = vmul.f32 %v308, %v576
        %v665 = vsel %vm408, %v664, 0.0
        %666 = vadd.xlane.f32.xlu0 %v665
        %v667 = vpop.xlane.xlu0 %666
        %v668 = vmul.f32 %v667, %v576
        %v669 = vsub.f32 %v663, %v668
        %v670 = vsel %vm408, %v669, -inf
        %671 = vmax.xlane.f32.xlu0 %v670
        %v672 = vpop.xlane.xlu0 %671
        %v673 = vsub.f32 %v669, %v672
        %v674 = vmul.f32 %v673, 1.442695
        %v675 = vpow.pop %v674
        %v676 = vsel %vm408, %v675, 0.0
        %677 = vadd.xlane.f32.xlu0 %v676
        %v678 = vpop.xlane.xlu0 %677
        %v679 = vlog2.pop %v678
        %v680 = vmul.f32 %v679, 0.6931472
        %v681 = vadd.f32 %v672, %v680
        %v682 = vmul.f32 %v669, %v576
        %v683 = vsel %vm408, %v682, 0.0
        %684 = vadd.xlane.f32.xlu0 %v683
        %v685 = vpop.xlane.xlu0 %684
        %v686 = vsub.f32 %v681, %v685
        %v687 = vmul.f32 %v309, %v576
        %v688 = vsel %vm408, %v687, 0.0
        %689 = vadd.xlane.f32.xlu0 %v688
        %v690 = vpop.xlane.xlu0 %689
        %p691 = scmp.lt.s32.totalorder %s571, 16
        %s692 = scalar_select %p691, 1, 0
        %s693 = scvt.s32.f32 %s692
        %v694 = vstv %s693
        %v695 = vmul.f32 %v690, %v694
        %v696 = vmul.f32 %v695, %v686
        %v697 = vadd.f32 %v569, %v696
        %v698 = vadd.f32 %v570, %v695
        %s699 = sadd.s32 %s294, 3
        %s700 = sld [smem:[#allocation5 + %s699]]
        %v701 = vstv %s700
        %vm702 = vcmp.eq.s32.totalorder %v311, %v701
        %v703 = vsel %vm702, 1, 0
        %v704 = vcvt.s32.f32 %v703
        %v705 = vmul.f32 %v304, %v704
        %v706 = vmul.f32 %v305, %v704
        %v707 = vmul.f32 %v306, %v704
        %v708 = vmul.f32 %v307, %v704
        %v709 = vsel %vm321, %v705, 0.0
        %710 = vadd.xlane.f32.xlu0 %v709
        %v711 = vpop.xlane.xlu0 %710
        %v712 = vsel %vm321, %v706, 0.0
        %713 = vadd.xlane.f32.xlu0 %v712
        %v714 = vpop.xlane.xlu0 %713
        %v715 = vsel %vm321, %v707, 0.0
        %716 = vadd.xlane.f32.xlu0 %v715
        %v717 = vpop.xlane.xlu0 %716
        %v718 = vsel %vm321, %v708, 0.0
        %719 = vadd.xlane.f32.xlu0 %v718
        %v720 = vpop.xlane.xlu0 %719
        %v721 = vsub.f32 %v304, %v711
        %v722 = vsub.f32 %v305, %v714
        %v723 = vsub.f32 %v306, %v717
        %v724 = vsub.f32 %v307, %v720
        %s725 = smul.u32 %s700, 32
        %s726 = scalar_lea.vmem [#allocation7], %s725
        %v727 = vld [vmem:[%s726] sm:$0xff]
        %v728 = vld [vmem:[%s726 + $0x8] sm:$0xff]
        %v729 = vld [vmem:[%s726 + $0x10] sm:$0xff]
        %v730 = vld [vmem:[%s726 + $0x18] sm:$0xff]
        %v732 = vsel %vm344, %v727, 0
        %v735 = vsel %vm344, %v728, 0
        %v738 = vsel %vm344, %v729, 0
        %v741 = vsel %vm344, %v730, 0
        %743 = vmatpush.msra.mxu0 0.0
        %744 = vmatpush.msra.mxu0 0.0
        %745 = vmatpush.msra.mxu0 0.0
        %746 = vmatpush.msra.mxu0 0.0
        %747 = vmatpush.msra.mxu0 0.0
        %748 = vmatpush.msra.mxu0 0.0
        %749 = vmatpush.msra.mxu0 0.0
        %750 = vmatpush.msra.mxu0 0.0
        %751 = vmatpush.msra.mxu0 0.0
        %752 = vmatpush.msra.mxu0 0.0
        %753 = vmatpush.msra.mxu0 0.0
        %754 = vmatpush.msra.mxu0 0.0
        %755 = vmatpush.msra.mxu0 %v724
        %756 = vmatpush.msra.mxu0 %v723
        %757 = vmatpush.msra.mxu0 %v722
        %758 = vmatpush.msra.mxu0 %v721
        %759 = vmatmul.f32.gmra.mxu0 %v732
        %v760 = vpop.f32.mrf.mxu0
        %v761 = vadd.f32 0.0, %v760
        %762 = vmatmul.f32.gmra.mxu0 %v735
        %v763 = vpop.f32.mrf.mxu0
        %v764 = vadd.f32 0.0, %v763
        %765 = vmatmul.f32.gmra.mxu0 %v738
        %v766 = vpop.f32.mrf.mxu0
        %v767 = vadd.f32 0.0, %v766
        %768 = vmatmul.f32.gmra.mxu0 %v741
        %v769 = vpop.f32.mrf.mxu0
        %v770 = vadd.f32 0.0, %v769
        %771 = vdwg.mxu0
        %v772 = vmul.f32 %v721, %v761
        %v773 = vmul.f32 %v722, %v764
        %v774 = vmul.f32 %v723, %v767
        %v775 = vmul.f32 %v724, %v770
        %v776 = vsel %vm321, %v772, 0.0
        %v777 = vsel %vm321, %v773, 0.0
        %v778 = vadd.f32 %v776, %v777
        %v779 = vsel %vm321, %v774, 0.0
        %v780 = vadd.f32 %v778, %v779
        %v781 = vsel %vm321, %v775, 0.0
        %v782 = vadd.f32 %v780, %v781
        %v783 = vrot.slane %v782, 4
        %v784 = vadd.f32 %v782, %v783
        %v785 = vrot.slane %v784, 2
        %v786 = vadd.f32 %v784, %v785
        %v787 = vrot.slane %v786, 1
        %v788 = vadd.f32 %v786, %v787
        %v789 = vld [vmem:[%s291 + $0x3] sm:$0x1]
        %v790 = vmul.f32 %v404, %v788
        %v791 = vadd.f32 %v789, %v790
        %v792 = vmul.f32 %v308, %v704
        %v793 = vsel %vm408, %v792, 0.0
        %794 = vadd.xlane.f32.xlu0 %v793
        %v795 = vpop.xlane.xlu0 %794
        %v796 = vmul.f32 %v795, %v704
        %v797 = vsub.f32 %v791, %v796
        %v798 = vsel %vm408, %v797, -inf
        %799 = vmax.xlane.f32.xlu0 %v798
        %v800 = vpop.xlane.xlu0 %799
        %v801 = vsub.f32 %v797, %v800
        %v802 = vmul.f32 %v801, 1.442695
        %v803 = vpow.pop %v802
        %v804 = vsel %vm408, %v803, 0.0
        %805 = vadd.xlane.f32.xlu0 %v804
        %v806 = vpop.xlane.xlu0 %805
        %v807 = vlog2.pop %v806
        %v808 = vmul.f32 %v807, 0.6931472
        %v809 = vadd.f32 %v800, %v808
        %v810 = vmul.f32 %v797, %v704
        %v811 = vsel %vm408, %v810, 0.0
        %812 = vadd.xlane.f32.xlu0 %v811
        %v813 = vpop.xlane.xlu0 %812
        %v814 = vsub.f32 %v809, %v813
        %v815 = vmul.f32 %v309, %v704
        %v816 = vsel %vm408, %v815, 0.0
        %817 = vadd.xlane.f32.xlu0 %v816
        %v818 = vpop.xlane.xlu0 %817
        %p819 = scmp.lt.s32.totalorder %s699, 16
        %s820 = scalar_select %p819, 1, 0
        %s821 = scvt.s32.f32 %s820
        %v822 = vstv %s821
        %v823 = vmul.f32 %v818, %v822
        %v824 = vmul.f32 %v823, %v814
        %v825 = vadd.f32 %v697, %v824
        %v826 = vadd.f32 %v698, %v823
        %s827 = sadd.s32 %s294, 4
        %s828 = sld [smem:[#allocation5 + %s827]]
        %v829 = vstv %s828
        %vm830 = vcmp.eq.s32.totalorder %v311, %v829
        %v831 = vsel %vm830, 1, 0
        %v832 = vcvt.s32.f32 %v831
        %v833 = vmul.f32 %v304, %v832
        %v834 = vmul.f32 %v305, %v832
        %v835 = vmul.f32 %v306, %v832
        %v836 = vmul.f32 %v307, %v832
        %v837 = vsel %vm321, %v833, 0.0
        %838 = vadd.xlane.f32.xlu0 %v837
        %v839 = vpop.xlane.xlu0 %838
        %v840 = vsel %vm321, %v834, 0.0
        %841 = vadd.xlane.f32.xlu0 %v840
        %v842 = vpop.xlane.xlu0 %841
        %v843 = vsel %vm321, %v835, 0.0
        %844 = vadd.xlane.f32.xlu0 %v843
        %v845 = vpop.xlane.xlu0 %844
        %v846 = vsel %vm321, %v836, 0.0
        %847 = vadd.xlane.f32.xlu0 %v846
        %v848 = vpop.xlane.xlu0 %847
        %v849 = vsub.f32 %v304, %v839
        %v850 = vsub.f32 %v305, %v842
        %v851 = vsub.f32 %v306, %v845
        %v852 = vsub.f32 %v307, %v848
        %s853 = smul.u32 %s828, 32
        %s854 = scalar_lea.vmem [#allocation7], %s853
        %v855 = vld [vmem:[%s854] sm:$0xff]
        %v856 = vld [vmem:[%s854 + $0x8] sm:$0xff]
        %v857 = vld [vmem:[%s854 + $0x10] sm:$0xff]
        %v858 = vld [vmem:[%s854 + $0x18] sm:$0xff]
        %v860 = vsel %vm344, %v855, 0
        %v863 = vsel %vm344, %v856, 0
        %v866 = vsel %vm344, %v857, 0
        %v869 = vsel %vm344, %v858, 0
        %871 = vmatpush.msra.mxu0 0.0
        %872 = vmatpush.msra.mxu0 0.0
        %873 = vmatpush.msra.mxu0 0.0
        %874 = vmatpush.msra.mxu0 0.0
        %875 = vmatpush.msra.mxu0 0.0
        %876 = vmatpush.msra.mxu0 0.0
        %877 = vmatpush.msra.mxu0 0.0
        %878 = vmatpush.msra.mxu0 0.0
        %879 = vmatpush.msra.mxu0 0.0
        %880 = vmatpush.msra.mxu0 0.0
        %881 = vmatpush.msra.mxu0 0.0
        %882 = vmatpush.msra.mxu0 0.0
        %883 = vmatpush.msra.mxu0 %v852
        %884 = vmatpush.msra.mxu0 %v851
        %885 = vmatpush.msra.mxu0 %v850
        %886 = vmatpush.msra.mxu0 %v849
        %887 = vmatmul.f32.gmra.mxu0 %v860
        %v888 = vpop.f32.mrf.mxu0
        %v889 = vadd.f32 0.0, %v888
        %890 = vmatmul.f32.gmra.mxu0 %v863
        %v891 = vpop.f32.mrf.mxu0
        %v892 = vadd.f32 0.0, %v891
        %893 = vmatmul.f32.gmra.mxu0 %v866
        %v894 = vpop.f32.mrf.mxu0
        %v895 = vadd.f32 0.0, %v894
        %896 = vmatmul.f32.gmra.mxu0 %v869
        %v897 = vpop.f32.mrf.mxu0
        %v898 = vadd.f32 0.0, %v897
        %899 = vdwg.mxu0
        %v900 = vmul.f32 %v849, %v889
        %v901 = vmul.f32 %v850, %v892
        %v902 = vmul.f32 %v851, %v895
        %v903 = vmul.f32 %v852, %v898
        %v904 = vsel %vm321, %v900, 0.0
        %v905 = vsel %vm321, %v901, 0.0
        %v906 = vadd.f32 %v904, %v905
        %v907 = vsel %vm321, %v902, 0.0
        %v908 = vadd.f32 %v906, %v907
        %v909 = vsel %vm321, %v903, 0.0
        %v910 = vadd.f32 %v908, %v909
        %v911 = vrot.slane %v910, 4
        %v912 = vadd.f32 %v910, %v911
        %v913 = vrot.slane %v912, 2
        %v914 = vadd.f32 %v912, %v913
        %v915 = vrot.slane %v914, 1
        %v916 = vadd.f32 %v914, %v915
        %v917 = vld [vmem:[%s291 + $0x4] sm:$0x1]
        %v918 = vmul.f32 %v404, %v916
        %v919 = vadd.f32 %v917, %v918
        %v920 = vmul.f32 %v308, %v832
        %v921 = vsel %vm408, %v920, 0.0
        %922 = vadd.xlane.f32.xlu0 %v921
        %v923 = vpop.xlane.xlu0 %922
        %v924 = vmul.f32 %v923, %v832
        %v925 = vsub.f32 %v919, %v924
        %v926 = vsel %vm408, %v925, -inf
        %927 = vmax.xlane.f32.xlu0 %v926
        %v928 = vpop.xlane.xlu0 %927
        %v929 = vsub.f32 %v925, %v928
        %v930 = vmul.f32 %v929, 1.442695
        %v931 = vpow.pop %v930
        %v932 = vsel %vm408, %v931, 0.0
        %933 = vadd.xlane.f32.xlu0 %v932
        %v934 = vpop.xlane.xlu0 %933
        %v935 = vlog2.pop %v934
        %v936 = vmul.f32 %v935, 0.6931472
        %v937 = vadd.f32 %v928, %v936
        %v938 = vmul.f32 %v925, %v832
        %v939 = vsel %vm408, %v938, 0.0
        %940 = vadd.xlane.f32.xlu0 %v939
        %v941 = vpop.xlane.xlu0 %940
        %v942 = vsub.f32 %v937, %v941
        %v943 = vmul.f32 %v309, %v832
        %v944 = vsel %vm408, %v943, 0.0
        %945 = vadd.xlane.f32.xlu0 %v944
        %v946 = vpop.xlane.xlu0 %945
        %p947 = scmp.lt.s32.totalorder %s827, 16
        %s948 = scalar_select %p947, 1, 0
        %s949 = scvt.s32.f32 %s948
        %v950 = vstv %s949
        %v951 = vmul.f32 %v946, %v950
        %v952 = vmul.f32 %v951, %v942
        %v953 = vadd.f32 %v825, %v952
        %v954 = vadd.f32 %v826, %v951
        %s955 = sadd.s32 %s294, 5
        %s956 = sld [smem:[#allocation5 + %s955]]
        %v957 = vstv %s956
        %vm958 = vcmp.eq.s32.totalorder %v311, %v957
        %v959 = vsel %vm958, 1, 0
        %v960 = vcvt.s32.f32 %v959
        %v961 = vmul.f32 %v304, %v960
        %v962 = vmul.f32 %v305, %v960
        %v963 = vmul.f32 %v306, %v960
        %v964 = vmul.f32 %v307, %v960
        %v965 = vsel %vm321, %v961, 0.0
        %966 = vadd.xlane.f32.xlu0 %v965
        %v967 = vpop.xlane.xlu0 %966
        %v968 = vsel %vm321, %v962, 0.0
        %969 = vadd.xlane.f32.xlu0 %v968
        %v970 = vpop.xlane.xlu0 %969
        %v971 = vsel %vm321, %v963, 0.0
        %972 = vadd.xlane.f32.xlu0 %v971
        %v973 = vpop.xlane.xlu0 %972
        %v974 = vsel %vm321, %v964, 0.0
        %975 = vadd.xlane.f32.xlu0 %v974
        %v976 = vpop.xlane.xlu0 %975
        %v977 = vsub.f32 %v304, %v967
        %v978 = vsub.f32 %v305, %v970
        %v979 = vsub.f32 %v306, %v973
        %v980 = vsub.f32 %v307, %v976
        %s981 = smul.u32 %s956, 32
        %s982 = scalar_lea.vmem [#allocation7], %s981
        %v983 = vld [vmem:[%s982] sm:$0xff]
        %v984 = vld [vmem:[%s982 + $0x8] sm:$0xff]
        %v985 = vld [vmem:[%s982 + $0x10] sm:$0xff]
        %v986 = vld [vmem:[%s982 + $0x18] sm:$0xff]
        %v988 = vsel %vm344, %v983, 0
        %v991 = vsel %vm344, %v984, 0
        %v994 = vsel %vm344, %v985, 0
        %v997 = vsel %vm344, %v986, 0
        %999 = vmatpush.msra.mxu0 0.0
        %1000 = vmatpush.msra.mxu0 0.0
        %1001 = vmatpush.msra.mxu0 0.0
        %1002 = vmatpush.msra.mxu0 0.0
        %1003 = vmatpush.msra.mxu0 0.0
        %1004 = vmatpush.msra.mxu0 0.0
        %1005 = vmatpush.msra.mxu0 0.0
        %1006 = vmatpush.msra.mxu0 0.0
        %1007 = vmatpush.msra.mxu0 0.0
        %1008 = vmatpush.msra.mxu0 0.0
        %1009 = vmatpush.msra.mxu0 0.0
        %1010 = vmatpush.msra.mxu0 0.0
        %1011 = vmatpush.msra.mxu0 %v980
        %1012 = vmatpush.msra.mxu0 %v979
        %1013 = vmatpush.msra.mxu0 %v978
        %1014 = vmatpush.msra.mxu0 %v977
        %1015 = vmatmul.f32.gmra.mxu0 %v988
        %v1016 = vpop.f32.mrf.mxu0
        %v1017 = vadd.f32 0.0, %v1016
        %1018 = vmatmul.f32.gmra.mxu0 %v991
        %v1019 = vpop.f32.mrf.mxu0
        %v1020 = vadd.f32 0.0, %v1019
        %1021 = vmatmul.f32.gmra.mxu0 %v994
        %v1022 = vpop.f32.mrf.mxu0
        %v1023 = vadd.f32 0.0, %v1022
        %1024 = vmatmul.f32.gmra.mxu0 %v997
        %v1025 = vpop.f32.mrf.mxu0
        %v1026 = vadd.f32 0.0, %v1025
        %1027 = vdwg.mxu0
        %v1028 = vmul.f32 %v977, %v1017
        %v1029 = vmul.f32 %v978, %v1020
        %v1030 = vmul.f32 %v979, %v1023
        %v1031 = vmul.f32 %v980, %v1026
        %v1032 = vsel %vm321, %v1028, 0.0
        %v1033 = vsel %vm321, %v1029, 0.0
        %v1034 = vadd.f32 %v1032, %v1033
        %v1035 = vsel %vm321, %v1030, 0.0
        %v1036 = vadd.f32 %v1034, %v1035
        %v1037 = vsel %vm321, %v1031, 0.0
        %v1038 = vadd.f32 %v1036, %v1037
        %v1039 = vrot.slane %v1038, 4
        %v1040 = vadd.f32 %v1038, %v1039
        %v1041 = vrot.slane %v1040, 2
        %v1042 = vadd.f32 %v1040, %v1041
        %v1043 = vrot.slane %v1042, 1
        %v1044 = vadd.f32 %v1042, %v1043
        %v1045 = vld [vmem:[%s291 + $0x5] sm:$0x1]
        %v1046 = vmul.f32 %v404, %v1044
        %v1047 = vadd.f32 %v1045, %v1046
        %v1048 = vmul.f32 %v308, %v960
        %v1049 = vsel %vm408, %v1048, 0.0
        %1050 = vadd.xlane.f32.xlu0 %v1049
        %v1051 = vpop.xlane.xlu0 %1050
        %v1052 = vmul.f32 %v1051, %v960
        %v1053 = vsub.f32 %v1047, %v1052
        %v1054 = vsel %vm408, %v1053, -inf
        %1055 = vmax.xlane.f32.xlu0 %v1054
        %v1056 = vpop.xlane.xlu0 %1055
        %v1057 = vsub.f32 %v1053, %v1056
        %v1058 = vmul.f32 %v1057, 1.442695
        %v1059 = vpow.pop %v1058
        %v1060 = vsel %vm408, %v1059, 0.0
        %1061 = vadd.xlane.f32.xlu0 %v1060
        %v1062 = vpop.xlane.xlu0 %1061
        %v1063 = vlog2.pop %v1062
        %v1064 = vmul.f32 %v1063, 0.6931472
        %v1065 = vadd.f32 %v1056, %v1064
        %v1066 = vmul.f32 %v1053, %v960
        %v1067 = vsel %vm408, %v1066, 0.0
        %1068 = vadd.xlane.f32.xlu0 %v1067
        %v1069 = vpop.xlane.xlu0 %1068
        %v1070 = vsub.f32 %v1065, %v1069
        %v1071 = vmul.f32 %v309, %v960
        %v1072 = vsel %vm408, %v1071, 0.0
        %1073 = vadd.xlane.f32.xlu0 %v1072
        %v1074 = vpop.xlane.xlu0 %1073
        %p1075 = scmp.lt.s32.totalorder %s955, 16
        %s1076 = scalar_select %p1075, 1, 0
        %s1077 = scvt.s32.f32 %s1076
        %v1078 = vstv %s1077
        %v1079 = vmul.f32 %v1074, %v1078
        %v1080 = vmul.f32 %v1079, %v1070
        %v1081 = vadd.f32 %v953, %v1080
        %v1082 = vadd.f32 %v954, %v1079
        %s1083 = sadd.s32 %s294, 6
        %s1084 = sld [smem:[#allocation5 + %s1083]]
        %v1085 = vstv %s1084
        %vm1086 = vcmp.eq.s32.totalorder %v311, %v1085
        %v1087 = vsel %vm1086, 1, 0
        %v1088 = vcvt.s32.f32 %v1087
        %v1089 = vmul.f32 %v304, %v1088
        %v1090 = vmul.f32 %v305, %v1088
        %v1091 = vmul.f32 %v306, %v1088
        %v1092 = vmul.f32 %v307, %v1088
        %v1093 = vsel %vm321, %v1089, 0.0
        %1094 = vadd.xlane.f32.xlu0 %v1093
        %v1095 = vpop.xlane.xlu0 %1094
        %v1096 = vsel %vm321, %v1090, 0.0
        %1097 = vadd.xlane.f32.xlu0 %v1096
        %v1098 = vpop.xlane.xlu0 %1097
        %v1099 = vsel %vm321, %v1091, 0.0
        %1100 = vadd.xlane.f32.xlu0 %v1099
        %v1101 = vpop.xlane.xlu0 %1100
        %v1102 = vsel %vm321, %v1092, 0.0
        %1103 = vadd.xlane.f32.xlu0 %v1102
        %v1104 = vpop.xlane.xlu0 %1103
        %v1105 = vsub.f32 %v304, %v1095
        %v1106 = vsub.f32 %v305, %v1098
        %v1107 = vsub.f32 %v306, %v1101
        %v1108 = vsub.f32 %v307, %v1104
        %s1109 = smul.u32 %s1084, 32
        %s1110 = scalar_lea.vmem [#allocation7], %s1109
        %v1111 = vld [vmem:[%s1110] sm:$0xff]
        %v1112 = vld [vmem:[%s1110 + $0x8] sm:$0xff]
        %v1113 = vld [vmem:[%s1110 + $0x10] sm:$0xff]
        %v1114 = vld [vmem:[%s1110 + $0x18] sm:$0xff]
        %v1116 = vsel %vm344, %v1111, 0
        %v1119 = vsel %vm344, %v1112, 0
        %v1122 = vsel %vm344, %v1113, 0
        %v1125 = vsel %vm344, %v1114, 0
        %1127 = vmatpush.msra.mxu0 0.0
        %1128 = vmatpush.msra.mxu0 0.0
        %1129 = vmatpush.msra.mxu0 0.0
        %1130 = vmatpush.msra.mxu0 0.0
        %1131 = vmatpush.msra.mxu0 0.0
        %1132 = vmatpush.msra.mxu0 0.0
        %1133 = vmatpush.msra.mxu0 0.0
        %1134 = vmatpush.msra.mxu0 0.0
        %1135 = vmatpush.msra.mxu0 0.0
        %1136 = vmatpush.msra.mxu0 0.0
        %1137 = vmatpush.msra.mxu0 0.0
        %1138 = vmatpush.msra.mxu0 0.0
        %1139 = vmatpush.msra.mxu0 %v1108
        %1140 = vmatpush.msra.mxu0 %v1107
        %1141 = vmatpush.msra.mxu0 %v1106
        %1142 = vmatpush.msra.mxu0 %v1105
        %1143 = vmatmul.f32.gmra.mxu0 %v1116
        %v1144 = vpop.f32.mrf.mxu0
        %v1145 = vadd.f32 0.0, %v1144
        %1146 = vmatmul.f32.gmra.mxu0 %v1119
        %v1147 = vpop.f32.mrf.mxu0
        %v1148 = vadd.f32 0.0, %v1147
        %1149 = vmatmul.f32.gmra.mxu0 %v1122
        %v1150 = vpop.f32.mrf.mxu0
        %v1151 = vadd.f32 0.0, %v1150
        %1152 = vmatmul.f32.gmra.mxu0 %v1125
        %v1153 = vpop.f32.mrf.mxu0
        %v1154 = vadd.f32 0.0, %v1153
        %1155 = vdwg.mxu0
        %v1156 = vmul.f32 %v1105, %v1145
        %v1157 = vmul.f32 %v1106, %v1148
        %v1158 = vmul.f32 %v1107, %v1151
        %v1159 = vmul.f32 %v1108, %v1154
        %v1160 = vsel %vm321, %v1156, 0.0
        %v1161 = vsel %vm321, %v1157, 0.0
        %v1162 = vadd.f32 %v1160, %v1161
        %v1163 = vsel %vm321, %v1158, 0.0
        %v1164 = vadd.f32 %v1162, %v1163
        %v1165 = vsel %vm321, %v1159, 0.0
        %v1166 = vadd.f32 %v1164, %v1165
        %v1167 = vrot.slane %v1166, 4
        %v1168 = vadd.f32 %v1166, %v1167
        %v1169 = vrot.slane %v1168, 2
        %v1170 = vadd.f32 %v1168, %v1169
        %v1171 = vrot.slane %v1170, 1
        %v1172 = vadd.f32 %v1170, %v1171
        %v1173 = vld [vmem:[%s291 + $0x6] sm:$0x1]
        %v1174 = vmul.f32 %v404, %v1172
        %v1175 = vadd.f32 %v1173, %v1174
        %v1176 = vmul.f32 %v308, %v1088
        %v1177 = vsel %vm408, %v1176, 0.0
        %1178 = vadd.xlane.f32.xlu0 %v1177
        %v1179 = vpop.xlane.xlu0 %1178
        %v1180 = vmul.f32 %v1179, %v1088
        %v1181 = vsub.f32 %v1175, %v1180
        %v1182 = vsel %vm408, %v1181, -inf
        %1183 = vmax.xlane.f32.xlu0 %v1182
        %v1184 = vpop.xlane.xlu0 %1183
        %v1185 = vsub.f32 %v1181, %v1184
        %v1186 = vmul.f32 %v1185, 1.442695
        %v1187 = vpow.pop %v1186
        %v1188 = vsel %vm408, %v1187, 0.0
        %1189 = vadd.xlane.f32.xlu0 %v1188
        %v1190 = vpop.xlane.xlu0 %1189
        %v1191 = vlog2.pop %v1190
        %v1192 = vmul.f32 %v1191, 0.6931472
        %v1193 = vadd.f32 %v1184, %v1192
        %v1194 = vmul.f32 %v1181, %v1088
        %v1195 = vsel %vm408, %v1194, 0.0
        %1196 = vadd.xlane.f32.xlu0 %v1195
        %v1197 = vpop.xlane.xlu0 %1196
        %v1198 = vsub.f32 %v1193, %v1197
        %v1199 = vmul.f32 %v309, %v1088
        %v1200 = vsel %vm408, %v1199, 0.0
        %1201 = vadd.xlane.f32.xlu0 %v1200
        %v1202 = vpop.xlane.xlu0 %1201
        %p1203 = scmp.lt.s32.totalorder %s1083, 16
        %s1204 = scalar_select %p1203, 1, 0
        %s1205 = scvt.s32.f32 %s1204
        %v1206 = vstv %s1205
        %v1207 = vmul.f32 %v1202, %v1206
        %v1208 = vmul.f32 %v1207, %v1198
        %v1209 = vadd.f32 %v1081, %v1208
        %v1210 = vadd.f32 %v1082, %v1207
        %s1211 = sadd.s32 %s294, 7
        %s1212 = sld [smem:[#allocation5 + %s1211]]
        %v1213 = vstv %s1212
        %vm1214 = vcmp.eq.s32.totalorder %v311, %v1213
        %v1215 = vsel %vm1214, 1, 0
        %v1216 = vcvt.s32.f32 %v1215
        %v1217 = vmul.f32 %v304, %v1216
        %v1218 = vmul.f32 %v305, %v1216
        %v1219 = vmul.f32 %v306, %v1216
        %v1220 = vmul.f32 %v307, %v1216
        %v1221 = vsel %vm321, %v1217, 0.0
        %1222 = vadd.xlane.f32.xlu0 %v1221
        %v1223 = vpop.xlane.xlu0 %1222
        %v1224 = vsel %vm321, %v1218, 0.0
        %1225 = vadd.xlane.f32.xlu0 %v1224
        %v1226 = vpop.xlane.xlu0 %1225
        %v1227 = vsel %vm321, %v1219, 0.0
        %1228 = vadd.xlane.f32.xlu0 %v1227
        %v1229 = vpop.xlane.xlu0 %1228
        %v1230 = vsel %vm321, %v1220, 0.0
        %1231 = vadd.xlane.f32.xlu0 %v1230
        %v1232 = vpop.xlane.xlu0 %1231
        %v1233 = vsub.f32 %v304, %v1223
        %v1234 = vsub.f32 %v305, %v1226
        %v1235 = vsub.f32 %v306, %v1229
        %v1236 = vsub.f32 %v307, %v1232
        %s1237 = smul.u32 %s1212, 32
        %s1238 = scalar_lea.vmem [#allocation7], %s1237
        %v1239 = vld [vmem:[%s1238] sm:$0xff]
        %v1240 = vld [vmem:[%s1238 + $0x8] sm:$0xff]
        %v1241 = vld [vmem:[%s1238 + $0x10] sm:$0xff]
        %v1242 = vld [vmem:[%s1238 + $0x18] sm:$0xff]
        %v1244 = vsel %vm344, %v1239, 0
        %v1247 = vsel %vm344, %v1240, 0
        %v1250 = vsel %vm344, %v1241, 0
        %v1253 = vsel %vm344, %v1242, 0
        %1255 = vmatpush.msra.mxu0 0.0
        %1256 = vmatpush.msra.mxu0 0.0
        %1257 = vmatpush.msra.mxu0 0.0
        %1258 = vmatpush.msra.mxu0 0.0
        %1259 = vmatpush.msra.mxu0 0.0
        %1260 = vmatpush.msra.mxu0 0.0
        %1261 = vmatpush.msra.mxu0 0.0
        %1262 = vmatpush.msra.mxu0 0.0
        %1263 = vmatpush.msra.mxu0 0.0
        %1264 = vmatpush.msra.mxu0 0.0
        %1265 = vmatpush.msra.mxu0 0.0
        %1266 = vmatpush.msra.mxu0 0.0
        %1267 = vmatpush.msra.mxu0 %v1236
        %1268 = vmatpush.msra.mxu0 %v1235
        %1269 = vmatpush.msra.mxu0 %v1234
        %1270 = vmatpush.msra.mxu0 %v1233
        %1271 = vmatmul.f32.gmra.mxu0 %v1244
        %v1272 = vpop.f32.mrf.mxu0
        %v1273 = vadd.f32 0.0, %v1272
        %1274 = vmatmul.f32.gmra.mxu0 %v1247
        %v1275 = vpop.f32.mrf.mxu0
        %v1276 = vadd.f32 0.0, %v1275
        %1277 = vmatmul.f32.gmra.mxu0 %v1250
        %v1278 = vpop.f32.mrf.mxu0
        %v1279 = vadd.f32 0.0, %v1278
        %1280 = vmatmul.f32.gmra.mxu0 %v1253
        %v1281 = vpop.f32.mrf.mxu0
        %v1282 = vadd.f32 0.0, %v1281
        %1283 = vdwg.mxu0
        %v1284 = vmul.f32 %v1233, %v1273
        %v1285 = vmul.f32 %v1234, %v1276
        %v1286 = vmul.f32 %v1235, %v1279
        %v1287 = vmul.f32 %v1236, %v1282
        %v1288 = vsel %vm321, %v1284, 0.0
        %v1289 = vsel %vm321, %v1285, 0.0
        %v1290 = vadd.f32 %v1288, %v1289
        %v1291 = vsel %vm321, %v1286, 0.0
        %v1292 = vadd.f32 %v1290, %v1291
        %v1293 = vsel %vm321, %v1287, 0.0
        %v1294 = vadd.f32 %v1292, %v1293
        %v1295 = vrot.slane %v1294, 4
        %v1296 = vadd.f32 %v1294, %v1295
        %v1297 = vrot.slane %v1296, 2
        %v1298 = vadd.f32 %v1296, %v1297
        %v1299 = vrot.slane %v1298, 1
        %v1300 = vadd.f32 %v1298, %v1299
        %v1301 = vld [vmem:[%s291 + $0x7] sm:$0x1]
        %v1302 = vmul.f32 %v404, %v1300
        %v1303 = vadd.f32 %v1301, %v1302
        %v1304 = vmul.f32 %v308, %v1216
        %v1305 = vsel %vm408, %v1304, 0.0
        %1306 = vadd.xlane.f32.xlu0 %v1305
        %v1307 = vpop.xlane.xlu0 %1306
        %v1308 = vmul.f32 %v1307, %v1216
        %v1309 = vsub.f32 %v1303, %v1308
        %v1310 = vsel %vm408, %v1309, -inf
        %1311 = vmax.xlane.f32.xlu0 %v1310
        %v1312 = vpop.xlane.xlu0 %1311
        %v1313 = vsub.f32 %v1309, %v1312
        %v1314 = vmul.f32 %v1313, 1.442695
        %v1315 = vpow.pop %v1314
        %v1316 = vsel %vm408, %v1315, 0.0
        %1317 = vadd.xlane.f32.xlu0 %v1316
        %v1318 = vpop.xlane.xlu0 %1317
        %v1319 = vlog2.pop %v1318
        %v1320 = vmul.f32 %v1319, 0.6931472
        %v1321 = vadd.f32 %v1312, %v1320
        %v1322 = vmul.f32 %v1309, %v1216
        %v1323 = vsel %vm408, %v1322, 0.0
        %1324 = vadd.xlane.f32.xlu0 %v1323
        %v1325 = vpop.xlane.xlu0 %1324
        %v1326 = vsub.f32 %v1321, %v1325
        %v1327 = vmul.f32 %v309, %v1216
        %v1328 = vsel %vm408, %v1327, 0.0
        %1329 = vadd.xlane.f32.xlu0 %v1328
        %v1330 = vpop.xlane.xlu0 %1329
        %p1331 = scmp.lt.s32.totalorder %s1211, 16
        %s1332 = scalar_select %p1331, 1, 0
        %s1333 = scvt.s32.f32 %s1332
        %v1334 = vstv %s1333
        %v1335 = vmul.f32 %v1330, %v1334
        %v1336 = vmul.f32 %v1335, %v1326
        %v1337 = vadd.f32 %v1209, %v1336
        %v1338 = vadd.f32 %v1210, %v1335
        %v1339 = vld [vmem:[#allocation2] sm:$0x1]
        %v1340 = vadd.f32 %v1339, %v1337
        %vm1341 = vcmask 0
        %1342 = vst.msk [vmem:[#allocation2] sm:$0x1] %vm1341, %v1340
        %v1343 = vld [vmem:[#allocation3] sm:$0x1]
        %v1344 = vadd.f32 %v1343, %v1338
        %1345 = vst.msk [vmem:[#allocation3] sm:$0x1] %vm1341, %v1344
        // Predicated region
        $region53: #{tpu_custom_call.1} parent=43 // pred_check
          %p1346 = pneg %p295
        $region54: #{tpu_custom_call.1} parent=43 // pred_check_branch
          %1348 = sbr.rel (%p1346) target = $region56
        $region55: #{tpu_custom_call.1} parent=43 // pred_region
          %v1349 = vlaneseq
          %v1350 = vshrl.u32 %v1349, 7
          %v1351 = vld [vmem:[#allocation2] sm:$0x1]
          %v1353 = vperm.slane %v1351, 0
          %1354 = vset.pattern.permute.xlu0 0
          %1355 = vperm.xlu0 %1354, %v1353
          %v1356 = vpop.permute.xlu0 %1355
          %v1358 = vld [vmem:[#allocation3] sm:$0x1]
          %v1360 = vperm.slane %v1358, 0
          %1361 = vset.pattern.permute.xlu0 0
          %1362 = vperm.xlu0 %1361, %v1360
          %v1363 = vpop.permute.xlu0 %1362
          %vm1365 = vcmp.eq.s32.totalorder %v1350, 0
          %vm1366 = vcmp.eq.s32.totalorder %v311, 0
          %vm1367 = vmand %vm1365, %vm1366
          %vm1368 = vcmp.eq.s32.totalorder %v311, 1
          %vm1369 = vmand %vm1365, %vm1368
          %v1370 = vsel %vm1369, %v1363, 0.0
          %v1371 = vsel %vm1367, %v1356, %v1370
          %1372 = vst [vmem:[%s286] sm:$0xff] %v1371
        $region56: #{tpu_custom_call.1} parent=43 // pred_fallthru
          _
        %s1373 = sand.u32 %s184, 1
        %s1374 = scalar_lea.sflag [#allocation9], %s1373
        %s1375 = sand.u32 %s184, 1
        %s1376 = smul.addr %s1375, 8
        %s1377 = scalar_lea.vmem [#allocation10], %s1376
        // Predicated region
        $region57: #{tpu_custom_call.1} parent=43 // pred_check
          %p1378 = pneg %p194
        $region58: #{tpu_custom_call.1} parent=43 // pred_check_branch
          %1380 = sbr.rel (%p1378) target = $region60
        $region59: #{tpu_custom_call.1} parent=43 // pred_region
          %1382 = vsyncadd %s1374, 0
          %s1383 = smul.addr %s35, 8
          %s1384 = scalar_lea.hbm %s7, %s1383
          %s1386 = sshll.u32 %s1377, 4
          %s1387 = int_to_ptr.vmem [resolvable:$true] %s1386
          %s1388 = sshll.u32 %s1384, 4
          %s1389 = int_to_ptr.hbm [resolvable:$true] %s1388
          %1391 = dma.vmem_to_hbm [thread:$0]  %s1387, 128, %s1389, %s1374
        $region60: #{tpu_custom_call.1} parent=43 // pred_fallthru
          _
      $region44: #{tpu_custom_call.1} parent=5 // pred_fallthru
        _
      %p1392 = scmp.le.s32.totalorder 2, %s26
      // Predicated region
      $region61: #{tpu_custom_call.1} parent=5 // pred_check
        %p1393 = pneg %p1392
      $region62: #{tpu_custom_call.1} parent=5 // pred_check_branch
        %1395 = sbr.rel (%p1393) target = $region64
      $region63: #{tpu_custom_call.1} parent=5 // pred_region
        %s1396 = ssub.s32 %s26, 2
        // Predicated region
        $region65: #{tpu_custom_call.1} parent=63 // pred_check
          %p1397 = pneg %p200
        $region66: #{tpu_custom_call.1} parent=63 // pred_check_branch
          %1399 = sbr.rel (%p1397) target = $region68
        $region67: #{tpu_custom_call.1} parent=63 // pred_region
          %s1400 = sand.u32 %s185, 1
          %s1401 = scalar_lea.sflag [#allocation9], %s1400
          %s1402 = sand.u32 %s185, 1
          %s1403 = smul.addr %s1402, 8
          %s1404 = scalar_lea.vmem [#allocation10], %s1403
          %1406 = dma.done %s1401, 128
        $region68: #{tpu_custom_call.1} parent=63 // pred_fallthru
          _
      $region64: #{tpu_custom_call.1} parent=5 // pred_fallthru
        _
    $region6: #{tpu_custom_call.1} parent=1 // loop_footer
      %s30 = sadd.s32 1, %s26
    $region7: #{tpu_custom_call.1} parent=1 // loop_footer_branch
      %25 = sbr.rel target = $region3
    $region8: #{tpu_custom_call.1} parent=1 // loop_exit
      _
    %1407 = vsyncpa [#allocation8], 1
    %s1408 = scalar_lea.sflag [#allocation8], 1
    %1409 = vsyncpa %s1408, 1
    %1410 = vsyncpa [#allocation9], 1
    %s1411 = scalar_lea.sflag [#allocation9], 1
    %1412 = vsyncpa %s1411, 1

</llo_original>
